<compile_context>
chip_gen: v7x
topology: tpu7x:2x2x1
jax: 0.10.0
libtpu: 0.0.40
codegen_flags: <defaults>
</compile_context>

<pallas_src>
import jax
import jax.numpy as jnp
from jax.experimental import pallas as pl
from jax.experimental.pallas import tpu as pltpu


# ----------------------------- Pallas kernel ------------------------------- #
def _attention_kernel(patches_ref, w_pe_ref, b_pe_ref, w_q_ref, w_k_ref,
                      w_v_ref, w_out_ref, b_out_ref, o_ref):
    """Fused patch-embed -> qkv -> head-batched MHA -> out projection.

    Block shapes (one batch element per grid step; weights are resident):
      patches_ref : (1, N, patch_dim)
      w_pe_ref    : (patch_dim, dim)        b_pe_ref : (1, dim)   [f32]
      w_q/k/v_ref : (heads, dim, dim_head)  (scale folded into w_q)
      w_out_ref   : (heads, dim_head, dim)  b_out_ref: (1, dim)   [f32]
      o_ref       : (1, N, dim)             [f32, lane-dense when dim % 128 == 0]
    """
    heads = w_q_ref.shape[0]
    seq = patches_ref.shape[1]
    dim = w_pe_ref.shape[1]
    cdt = w_q_ref.dtype                      # compute dtype (f32 or bf16)

    # --- to_patch_embedding: Linear(patch_dim -> dim), f32 accumulation ---
    x = jnp.dot(patches_ref[0], w_pe_ref[...],
                preferred_element_type=jnp.float32) + b_pe_ref[...]   # (N, dim) f32

    # --- q/k/v projections, batched over heads (no reshape/transpose) ---
    xh = jnp.broadcast_to(x.astype(cdt), (heads, seq, dim))           # (H, N, dim)
    q = jnp.einsum('hnk,hkd->hnd', xh, w_q_ref[...],
                   preferred_element_type=jnp.float32)                # (H, N, dh)
    k = jnp.einsum('hnk,hkd->hnd', xh, w_k_ref[...],
                   preferred_element_type=jnp.float32)
    v = jnp.einsum('hnk,hkd->hnd', xh, w_v_ref[...],
                   preferred_element_type=jnp.float32)

    # --- scores: Q.K^T, batched over heads; scale already folded into w_q ---
    s = jnp.einsum('hqd,hkd->hqk', q.astype(cdt), k.astype(cdt),
                   preferred_element_type=jnp.float32)                # (H, N, N) f32

    # --- numerically stable softmax; stats in f32, reciprocal on the EUP ---
    m = jnp.max(s, axis=-1, keepdims=True)
    p = jnp.exp(s - m)
    denom = jnp.sum(p, axis=-1, keepdims=True)
    attn = p * pl.reciprocal(denom, approx=True)

    # --- attention output, batched over heads ---
    ctx = jnp.einsum('hqk,hkd->hqd', attn.astype(cdt), v.astype(cdt),
                     preferred_element_type=jnp.float32)              # (H, N, dh)

    # --- to_out: per-head partial projections summed over the leading axis
    #     (equivalent to concat(heads) @ w_out, but without a lane concat) ---
    partial = jnp.einsum('hnd,hdo->hno', ctx.astype(cdt), w_out_ref[...],
                         preferred_element_type=jnp.float32)          # (H, N, dim)
    out = jnp.sum(partial, axis=0) + b_out_ref[...]                   # (N, dim)

    o_ref[0] = out.astype(o_ref.dtype)


# ------------------------------ JAX wrapper -------------------------------- #
def _patchify(images, patch_h, patch_w):
    """einops: 'b c (h p1) (w p2) -> b (h w) (p1 p2 c)'  (pure-JAX glue)."""
    b, c, H, W = images.shape
    h, w = H // patch_h, W // patch_w
    x = images.reshape(b, c, h, patch_h, w, patch_w)
    x = x.transpose(0, 2, 4, 3, 5, 1)          # b h w p1 p2 c
    return x.reshape(b, h * w, patch_h * patch_w * c)


def attention_forward(images, params, *, patch_size, heads, dim_head,
                      compute_dtype=jnp.float32):
    patch_h, patch_w = patch_size
    patches = _patchify(images, patch_h, patch_w)             # (B, N, patch_dim)
    B, N, patch_dim = patches.shape
    dim = params["w_pe"].shape[1]
    scale = float(dim_head) ** -0.5

    # --- weight prep (pure-JAX, outside the kernel): split qkv, move heads to
    # a leading axis, fold the softmax scale into the q projection, cast. ---
    w_q, w_k, w_v = jnp.split(params["w_qkv"], 3, axis=1)     # (dim, H*dh) each

    def per_head(w):                                          # -> (H, dim, dh)
        return jnp.transpose(w.reshape(dim, heads, dim_head), (1, 0, 2))

    w_qh = (per_head(w_q) * scale).astype(compute_dtype)
    w_kh = per_head(w_k).astype(compute_dtype)
    w_vh = per_head(w_v).astype(compute_dtype)
    w_oh = params["w_out"].reshape(heads, dim_head, dim).astype(compute_dtype)
    w_pe = params["w_pe"].astype(compute_dtype)
    b_pe = params["b_pe"].astype(jnp.float32)                 # biases stay f32
    b_out = params["b_out"].astype(jnp.float32)
    patches = patches.astype(compute_dtype)

    out = pl.pallas_call(
        _attention_kernel,
        out_shape=jax.ShapeDtypeStruct((B, N, dim), jnp.float32),
        grid_spec=pltpu.PrefetchScalarGridSpec(
            num_scalar_prefetch=0,
            grid=(B,),
            in_specs=[
                pl.BlockSpec((1, N, patch_dim), lambda b: (b, 0, 0)),
                pl.BlockSpec((patch_dim, dim), lambda b: (0, 0)),
                pl.BlockSpec((1, dim), lambda b: (0, 0)),
                pl.BlockSpec((heads, dim, dim_head), lambda b: (0, 0, 0)),
                pl.BlockSpec((heads, dim, dim_head), lambda b: (0, 0, 0)),
                pl.BlockSpec((heads, dim, dim_head), lambda b: (0, 0, 0)),
                pl.BlockSpec((heads, dim_head, dim), lambda b: (0, 0, 0)),
                pl.BlockSpec((1, dim), lambda b: (0, 0)),
            ],
            out_specs=pl.BlockSpec((1, N, dim), lambda b: (b, 0, 0)),
        ),
        compiler_params=pltpu.CompilerParams(
            dimension_semantics=("parallel",)),   # batch axis feeds v7x's 2nd TC
    )(patches, w_pe, b_pe, w_qh, w_kh, w_vh, w_oh, b_out)
    return out


# --------------------------- deterministic init ----------------------------- #
def init_params(key, *, dim, patch_dim, heads, dim_head):
    inner_dim = heads * dim_head
    ks = jax.random.split(key, 5)

    def uniform(k, shape, fan_in):
        bound = 1.0 / (fan_in ** 0.5)
        return jax.random.uniform(k, shape, jnp.float32, -bound, bound)

    return {
        # nn.Linear stores weight as (out, in); we keep (in, out) so the math
        # is x @ W (same as x @ W_torch.T).
        "w_pe":  uniform(ks[0], (patch_dim, dim), patch_dim),
        "b_pe":  uniform(ks[1], (1, dim), patch_dim),
        "w_qkv": uniform(ks[2], (dim, 3 * inner_dim), dim),
        "w_out": uniform(ks[3], (inner_dim, dim), inner_dim),
        "b_out": uniform(ks[4], (1, dim), inner_dim),
    }


# ------------------------------- reference ---------------------------------- #
def reference_forward(images, params, *, patch_size, heads, dim_head):
    x = _patchify(images, *patch_size)
    x = x @ params["w_pe"] + params["b_pe"]
    qkv = x @ params["w_qkv"]
    q, k, v = jnp.split(qkv, 3, axis=-1)

    def split_heads(t):  # b n (h d) -> b h n d
        b, n, _ = t.shape
        return t.reshape(b, n, heads, dim_head).transpose(0, 2, 1, 3)

    q, k, v = map(split_heads, (q, k, v))
    dots = jnp.einsum("bhnd,bhmd->bhnm", q, k) * (dim_head ** -0.5)
    attn = jax.nn.softmax(dots, axis=-1)
    out = jnp.einsum("bhnm,bhmd->bhnd", attn, v)
    b, h, n, d = out.shape
    out = out.transpose(0, 2, 1, 3).reshape(b, n, h * d)
    return out @ params["w_out"] + params["b_out"]


# --------------------------------- main ------------------------------------- #
if __name__ == "__main__":
    # Small config; dim and inner_dim chosen as multiples of 128 so all matmul
    # operands and the output store are lane-dense.
    batch, channels = 2, 4
    image_size, patch_size = (16, 16), (4, 4)
    dim, heads, dim_head = 128, 4, 32
    patch_dim = channels * patch_size[0] * patch_size[1]     # 64
    num_patches = (image_size[0] // patch_size[0]) * (image_size[1] // patch_size[1])

    key = jax.random.PRNGKey(0)
    k_img, k_par = jax.random.split(key)

    images = jax.random.normal(
        k_img, (batch, channels, image_size[0], image_size[1]), jnp.float32)
    params = init_params(k_par, dim=dim, patch_dim=patch_dim,
                         heads=heads, dim_head=dim_head)

    ref = reference_forward(images, params,
                            patch_size=patch_size, heads=heads,
                            dim_head=dim_head)

    # f32 compute path (tolerance accounts for the approximate EUP reciprocal
    # used in the softmax normalization).
    out_f32 = attention_forward(images, params,
                                patch_size=patch_size, heads=heads,
                                dim_head=dim_head,
                                compute_dtype=jnp.float32)
    out_f32 = jax.block_until_ready(out_f32)
    assert out_f32.shape == ref.shape == (batch, num_patches, dim)
    assert jnp.allclose(out_f32, ref, atol=5e-3, rtol=5e-3), "f32 mismatch vs reference"

    # bf16 compute path (v6e/v7x MXU-friendly): bf16 weights/activations into the
    # MXU, f32 accumulation and f32 softmax statistics inside the kernel.
    out_bf16 = attention_forward(images, params,
                                 patch_size=patch_size, heads=heads,
                                 dim_head=dim_head,
                                 compute_dtype=jnp.bfloat16)
    out_bf16 = jax.block_until_ready(out_bf16)
    assert jnp.allclose(out_bf16, ref, atol=5e-2, rtol=5e-2), "bf16 mismatch vs reference"

    print("KERNEL_OK")
</pallas_src>

<mosaic_0001>
module attributes {stable_mosaic.version = 11 : i64} {
  func.func @_attention_kernel(%arg0: i32, %arg1: memref<1x16x64xf32, #tpu.memory_space<vmem>>, %arg2: memref<64x128xf32, #tpu.memory_space<vmem>>, %arg3: memref<1x128xf32, #tpu.memory_space<vmem>>, %arg4: memref<4x128x32xf32, #tpu.memory_space<vmem>>, %arg5: memref<4x128x32xf32, #tpu.memory_space<vmem>>, %arg6: memref<4x128x32xf32, #tpu.memory_space<vmem>>, %arg7: memref<4x32x128xf32, #tpu.memory_space<vmem>>, %arg8: memref<1x128xf32, #tpu.memory_space<vmem>>, %arg9: memref<1x16x128xf32, #tpu.memory_space<vmem>>) attributes {dimension_semantics = [#tpu.dimension_semantics<parallel>], iteration_bounds = array<i64: 2>, scalar_prefetch = 0 : i64, scratch_operands = 0 : i64, tpu.core_type = #tpu.core_type<tc>, window_params = [{transform_indices = @transform_0, window_bounds = array<i64: 1, 16, 64>}, {pipeline_mode = #tpu.pipeline_mode<synchronous>, transform_indices = @transform_1, window_bounds = array<i64: 64, 128>}, {pipeline_mode = #tpu.pipeline_mode<synchronous>, transform_indices = @transform_2, window_bounds = array<i64: 1, 128>}, {pipeline_mode = #tpu.pipeline_mode<synchronous>, transform_indices = @transform_3, window_bounds = array<i64: 4, 128, 32>}, {pipeline_mode = #tpu.pipeline_mode<synchronous>, transform_indices = @transform_4, window_bounds = array<i64: 4, 128, 32>}, {pipeline_mode = #tpu.pipeline_mode<synchronous>, transform_indices = @transform_5, window_bounds = array<i64: 4, 128, 32>}, {pipeline_mode = #tpu.pipeline_mode<synchronous>, transform_indices = @transform_6, window_bounds = array<i64: 4, 32, 128>}, {pipeline_mode = #tpu.pipeline_mode<synchronous>, transform_indices = @transform_7, window_bounds = array<i64: 1, 128>}, {transform_indices = @transform_8, window_bounds = array<i64: 1, 16, 128>}]} {
    %c0 = arith.constant 0 : index
    %c0_0 = arith.constant 0 : index
    %c0_1 = arith.constant 0 : index
    %0 = vector.load %arg1[%c0, %c0_0, %c0_1] : memref<1x16x64xf32, #tpu.memory_space<vmem>>, vector<1x16x64xf32>
    %1 = vector.shape_cast %0 : vector<1x16x64xf32> to vector<16x64xf32>
    %c0_2 = arith.constant 0 : index
    %c0_3 = arith.constant 0 : index
    %2 = vector.load %arg2[%c0_2, %c0_3] : memref<64x128xf32, #tpu.memory_space<vmem>>, vector<64x128xf32>
    %cst = arith.constant dense<0.000000e+00> : vector<16x128xf32>
    %3 = tpu.matmul %1, %2, %cst {dimension_numbers = #tpu.dot_dimension_numbers<[1], [0], [0], [1], [0, 0, 1, 1], [], []>} : vector<16x64xf32>, vector<64x128xf32>, vector<16x128xf32> -> vector<16x128xf32>
    %c0_4 = arith.constant 0 : index
    %c0_5 = arith.constant 0 : index
    %4 = vector.load %arg3[%c0_4, %c0_5] : memref<1x128xf32, #tpu.memory_space<vmem>>, vector<1x128xf32>
    %5 = vector.broadcast %4 : vector<1x128xf32> to vector<16x128xf32>
    %6 = arith.addf %3, %5 : vector<16x128xf32>
    %7 = vector.shape_cast %6 : vector<16x128xf32> to vector<1x16x128xf32>
    %8 = vector.broadcast %7 : vector<1x16x128xf32> to vector<4x16x128xf32>
    %c0_6 = arith.constant 0 : index
    %c0_7 = arith.constant 0 : index
    %c0_8 = arith.constant 0 : index
    %9 = vector.load %arg4[%c0_6, %c0_7, %c0_8] : memref<4x128x32xf32, #tpu.memory_space<vmem>>, vector<4x128x32xf32>
    "tpu.trace_start"() <{level = 10 : i32, message = "hnk,hkd->hnd"}> : () -> ()
    %cst_9 = arith.constant dense<0.000000e+00> : vector<4x16x32xf32>
    %10 = tpu.matmul %8, %9, %cst_9 {dimension_numbers = #tpu.dot_dimension_numbers<[2], [1], [1], [2], [0, 0, 0, 1, 1, 2], [0], [0]>} : vector<4x16x128xf32>, vector<4x128x32xf32>, vector<4x16x32xf32> -> vector<4x16x32xf32>
    "tpu.trace_stop"() : () -> ()
    %c0_10 = arith.constant 0 : index
    %c0_11 = arith.constant 0 : index
    %c0_12 = arith.constant 0 : index
    %11 = vector.load %arg5[%c0_10, %c0_11, %c0_12] : memref<4x128x32xf32, #tpu.memory_space<vmem>>, vector<4x128x32xf32>
    "tpu.trace_start"() <{level = 10 : i32, message = "hnk,hkd->hnd"}> : () -> ()
    %cst_13 = arith.constant dense<0.000000e+00> : vector<4x16x32xf32>
    %12 = tpu.matmul %8, %11, %cst_13 {dimension_numbers = #tpu.dot_dimension_numbers<[2], [1], [1], [2], [0, 0, 0, 1, 1, 2], [0], [0]>} : vector<4x16x128xf32>, vector<4x128x32xf32>, vector<4x16x32xf32> -> vector<4x16x32xf32>
    "tpu.trace_stop"() : () -> ()
    %c0_14 = arith.constant 0 : index
    %c0_15 = arith.constant 0 : index
    %c0_16 = arith.constant 0 : index
    %13 = vector.load %arg6[%c0_14, %c0_15, %c0_16] : memref<4x128x32xf32, #tpu.memory_space<vmem>>, vector<4x128x32xf32>
    "tpu.trace_start"() <{level = 10 : i32, message = "hnk,hkd->hnd"}> : () -> ()
    %cst_17 = arith.constant dense<0.000000e+00> : vector<4x16x32xf32>
    %14 = tpu.matmul %8, %13, %cst_17 {dimension_numbers = #tpu.dot_dimension_numbers<[2], [1], [1], [2], [0, 0, 0, 1, 1, 2], [0], [0]>} : vector<4x16x128xf32>, vector<4x128x32xf32>, vector<4x16x32xf32> -> vector<4x16x32xf32>
    "tpu.trace_stop"() : () -> ()
    "tpu.trace_start"() <{level = 10 : i32, message = "hqd,hkd->hqk"}> : () -> ()
    %cst_18 = arith.constant dense<0.000000e+00> : vector<4x16x16xf32>
    %15 = tpu.matmul %10, %12, %cst_18 {dimension_numbers = #tpu.dot_dimension_numbers<[2], [2], [1], [1], [0, 0, 0, 1, 1, 1], [0], [0]>} : vector<4x16x32xf32>, vector<4x16x32xf32>, vector<4x16x16xf32> -> vector<4x16x16xf32>
    "tpu.trace_stop"() : () -> ()
    %cst_19 = arith.constant dense<0xFF800000> : vector<4x16xf32>
    %16 = vector.multi_reduction <maximumf>, %15, %cst_19 [2] : vector<4x16x16xf32> to vector<4x16xf32>
    %17 = vector.shape_cast %16 : vector<4x16xf32> to vector<4x16x1xf32>
    %18 = vector.broadcast %17 : vector<4x16x1xf32> to vector<4x16x16xf32>
    %19 = arith.subf %15, %18 : vector<4x16x16xf32>
    %20 = math.exp %19 : vector<4x16x16xf32>
    %cst_20 = arith.constant dense<0.000000e+00> : vector<4x16xf32>
    %21 = vector.multi_reduction <add>, %20, %cst_20 [2] : vector<4x16x16xf32> to vector<4x16xf32>
    %22 = vector.shape_cast %21 : vector<4x16xf32> to vector<4x16x1xf32>
    %23 = tpu.reciprocal %22 {approx = true} : vector<4x16x1xf32> -> vector<4x16x1xf32>
    %24 = vector.broadcast %23 : vector<4x16x1xf32> to vector<4x16x16xf32>
    %25 = arith.mulf %20, %24 : vector<4x16x16xf32>
    "tpu.trace_start"() <{level = 10 : i32, message = "hqk,hkd->hqd"}> : () -> ()
    %cst_21 = arith.constant dense<0.000000e+00> : vector<4x16x32xf32>
    %26 = tpu.matmul %25, %14, %cst_21 {dimension_numbers = #tpu.dot_dimension_numbers<[2], [1], [1], [2], [0, 0, 0, 1, 1, 2], [0], [0]>} : vector<4x16x16xf32>, vector<4x16x32xf32>, vector<4x16x32xf32> -> vector<4x16x32xf32>
    "tpu.trace_stop"() : () -> ()
    %c0_22 = arith.constant 0 : index
    %c0_23 = arith.constant 0 : index
    %c0_24 = arith.constant 0 : index
    %27 = vector.load %arg7[%c0_22, %c0_23, %c0_24] : memref<4x32x128xf32, #tpu.memory_space<vmem>>, vector<4x32x128xf32>
    "tpu.trace_start"() <{level = 10 : i32, message = "hnd,hdo->hno"}> : () -> ()
    %cst_25 = arith.constant dense<0.000000e+00> : vector<4x16x128xf32>
    %28 = tpu.matmul %26, %27, %cst_25 {dimension_numbers = #tpu.dot_dimension_numbers<[2], [1], [1], [2], [0, 0, 0, 1, 1, 2], [0], [0]>} : vector<4x16x32xf32>, vector<4x32x128xf32>, vector<4x16x128xf32> -> vector<4x16x128xf32>
    "tpu.trace_stop"() : () -> ()
    %cst_26 = arith.constant dense<0.000000e+00> : vector<16x128xf32>
    %29 = vector.multi_reduction <add>, %28, %cst_26 [0] : vector<4x16x128xf32> to vector<16x128xf32>
    %c0_27 = arith.constant 0 : index
    %c0_28 = arith.constant 0 : index
    %30 = vector.load %arg8[%c0_27, %c0_28] : memref<1x128xf32, #tpu.memory_space<vmem>>, vector<1x128xf32>
    %31 = vector.broadcast %30 : vector<1x128xf32> to vector<16x128xf32>
    %32 = arith.addf %29, %31 : vector<16x128xf32>
    %c0_29 = arith.constant 0 : index
    %c0_30 = arith.constant 0 : index
    %c0_31 = arith.constant 0 : index
    %33 = vector.load %arg9[%c0_29, %c0_30, %c0_31] : memref<1x16x128xf32, #tpu.memory_space<vmem>>, vector<1x16x128xf32>
    %34 = vector.shape_cast %33 : vector<1x16x128xf32> to vector<16x128xf32>
    %35 = vector.shape_cast %32 : vector<16x128xf32> to vector<1x16x128xf32>
    tpu.vector_store %arg9[%c0_29, %c0_30, %c0_31], %35 {strides = array<i32>} : memref<1x16x128xf32, #tpu.memory_space<vmem>>, vector<1x16x128xf32>,
    return
  }
  func.func @transform_0(%arg0: i32) -> (i32, i32, i32) {
    %c0_i32 = arith.constant 0 : i32
    %c0_i32_0 = arith.constant 0 : i32
    %c0_i32_1 = arith.constant 0 : i32
    return %arg0, %c0_i32, %c0_i32_0 : i32, i32, i32
  }
  func.func @transform_1(%arg0: i32) -> (i32, i32) {
    %c0_i32 = arith.constant 0 : i32
    %c0_i32_0 = arith.constant 0 : i32
    %c0_i32_1 = arith.constant 0 : i32
    return %c0_i32, %c0_i32_0 : i32, i32
  }
  func.func @transform_2(%arg0: i32) -> (i32, i32) {
    %c0_i32 = arith.constant 0 : i32
    %c0_i32_0 = arith.constant 0 : i32
    %c0_i32_1 = arith.constant 0 : i32
    return %c0_i32, %c0_i32_0 : i32, i32
  }
  func.func @transform_3(%arg0: i32) -> (i32, i32, i32) {
    %c0_i32 = arith.constant 0 : i32
    %c0_i32_0 = arith.constant 0 : i32
    %c0_i32_1 = arith.constant 0 : i32
    %c0_i32_2 = arith.constant 0 : i32
    return %c0_i32, %c0_i32_0, %c0_i32_1 : i32, i32, i32
  }
  func.func @transform_4(%arg0: i32) -> (i32, i32, i32) {
    %c0_i32 = arith.constant 0 : i32
    %c0_i32_0 = arith.constant 0 : i32
    %c0_i32_1 = arith.constant 0 : i32
    %c0_i32_2 = arith.constant 0 : i32
    return %c0_i32, %c0_i32_0, %c0_i32_1 : i32, i32, i32
  }
  func.func @transform_5(%arg0: i32) -> (i32, i32, i32) {
    %c0_i32 = arith.constant 0 : i32
    %c0_i32_0 = arith.constant 0 : i32
    %c0_i32_1 = arith.constant 0 : i32
    %c0_i32_2 = arith.constant 0 : i32
    return %c0_i32, %c0_i32_0, %c0_i32_1 : i32, i32, i32
  }
  func.func @transform_6(%arg0: i32) -> (i32, i32, i32) {
    %c0_i32 = arith.constant 0 : i32
    %c0_i32_0 = arith.constant 0 : i32
    %c0_i32_1 = arith.constant 0 : i32
    %c0_i32_2 = arith.constant 0 : i32
    return %c0_i32, %c0_i32_0, %c0_i32_1 : i32, i32, i32
  }
  func.func @transform_7(%arg0: i32) -> (i32, i32) {
    %c0_i32 = arith.constant 0 : i32
    %c0_i32_0 = arith.constant 0 : i32
    %c0_i32_1 = arith.constant 0 : i32
    return %c0_i32, %c0_i32_0 : i32, i32
  }
  func.func @transform_8(%arg0: i32) -> (i32, i32, i32) {
    %c0_i32 = arith.constant 0 : i32
    %c0_i32_0 = arith.constant 0 : i32
    %c0_i32_1 = arith.constant 0 : i32
    return %arg0, %c0_i32, %c0_i32_0 : i32, i32, i32
  }
}

</mosaic_0001>

<llo_original>
// kernel: tpu_custom_call.1
$region0: #{tpu_custom_call.1}
  #allocation0 [shape = 'u32[]', space=smem, size = 0x4, offset = 0x4, fixed_abs, tag = 'smem constant byte address 0x4 - core index']
  #allocation1 [shape = 'u32[144,128]{1,0:T(1,128)}', space=vmem, size = 0x12000, scoped, tag = 'internal scratch']
  %s0 = inlined_call_operand.vmem [shape: f32[2,16,64], index: 0, kind: input, shape index: {}]
  %s1 = inlined_call_operand.vmem [shape: f32[64,128], index: 1, kind: input, shape index: {}]
  %s2 = inlined_call_operand.vmem [shape: f32[1,128], index: 2, kind: input, shape index: {}]
  %s3 = inlined_call_operand.vmem [shape: f32[4,128,32], index: 3, kind: input, shape index: {}]
  %s4 = inlined_call_operand.vmem [shape: f32[4,128,32], index: 4, kind: input, shape index: {}]
  %s5 = inlined_call_operand.vmem [shape: f32[4,128,32], index: 5, kind: input, shape index: {}]
  %s6 = inlined_call_operand.vmem [shape: f32[4,32,128], index: 6, kind: input, shape index: {}]
  %s7 = inlined_call_operand.vmem [shape: f32[1,128], index: 7, kind: input, shape index: {}]
  %s8 = inlined_call_operand.hbm [shape: f32[2,16,128], index: 8, kind: output, shape index: {}]
  %s9 = sld [smem:[#allocation0]]
  $region65: #{tpu_custom_call.1} parent=0
    _
  %s11 = ssub.s32 1, %s9
  %s12 = scalar_select 0, %s11, %s9
  $region1: #{tpu_custom_call.1} parent=0
    #allocation2 [shape = 'u8[16384]{0}', space=vmem, size = 0x4000, scoped, tag = 'output window, operand 0']
    #allocation3 [shape = 's32[2]{0}', space=sflag, size = 0x8, scoped, tag = 'scoped memory for tpu_custom_call.1']
    %13 = vsyncpa [#allocation3], 0
    %s14 = scalar_lea.sflag [#allocation3], 1
    %15 = vsyncpa %s14, 0
    loop: start=0, step=1, limit=4
    $region2: #{tpu_custom_call.1} parent=1 // loop_pre_header
      _
    $region3: #{tpu_custom_call.1} parent=1 // loop_header
      %s17 = sphi 0, %s21
      %p18 = scmp.ge.s32.totalorder %s17, 4
      %s27 = sphi 0, %s29
      %s30 = sphi 0, %s27
      %s31 = sphi 0, %s30
      %s47 = sphi 0, %s31
      %s51 = sphi 0, %s51
      %s53 = sphi 0, %s51
      %s54 = sphi 0, %s53
      %s68 = sphi 0, %s54
      %s72 = sphi 0, %s72
      %s74 = sphi 0, %s72
      %s75 = sphi 0, %s74
      %s89 = sphi 0, %s75
      %s93 = sphi 0, %s93
      %s95 = sphi 0, %s93
      %s96 = sphi 0, %s95
      %s110 = sphi 0, %s96
      %s114 = sphi 0, %s114
      %s116 = sphi 0, %s114
      %s117 = sphi 0, %s116
      %s131 = sphi 0, %s117
      %s135 = sphi 0, %s135
      %s137 = sphi 0, %s135
      %s138 = sphi 0, %s137
      %s152 = sphi 0, %s138
      %s156 = sphi 0, %s156
      %s158 = sphi 0, %s156
      %s159 = sphi 0, %s158
      %s173 = sphi 0, %s159
      %s177 = sphi 0, %s177
      %s179 = sphi 0, %s177
      %s180 = sphi 0, %s179
      %s194 = sphi 0, %s180
      %s200 = sphi 0, %s202
      %s203 = sphi 0, %s200
      %s204 = sphi 0, %s203
      %s220 = sphi 0, %s204
    $region4: #{tpu_custom_call.1} parent=1 // loop_header_branch
      %20 = sbr.rel (%p18) target = $region8
    $region5: #{tpu_custom_call.1} parent=1 // loop_body
      %s22 = ssub.s32 %s17, 1
      %s23 = ssub.s32 %s17, 2
      %s24 = sadd.s32 %s17, 1
      %s25 = ssub.s32 %s17, %s24
      %p26 = scmp.eq.s32.totalorder %s25, 0
      %s28 = sadd.s32 %s27, 1
      %s29 = scalar_select %p26, %s27, %s28
      %p32 = pneg %p26
      %p33 = scmp.eq.s32.totalorder %s17, 1
      %p34 = por %p32, %p33
      %p35 = scmp.ne.s32.totalorder %s27, %s30
      %p36 = scmp.eq.s32.totalorder %s17, 0
      %p37 = por %p35, %p36
      %p38 = scmp.ne.s32.totalorder %s27, %s30
      %p39 = scmp.eq.s32.totalorder %s22, 1
      %p40 = por %p38, %p39
      %p41 = scmp.ne.s32.totalorder %s30, %s31
      %p42 = scmp.eq.s32.totalorder %s22, 0
      %p43 = por %p41, %p42
      %p44 = scmp.ne.s32.totalorder %s30, %s31
      %p45 = scmp.eq.s32.totalorder %s23, 1
      %p46 = por %p44, %p45
      %p48 = scmp.ne.s32.totalorder %s31, %s47
      %p49 = scmp.eq.s32.totalorder %s23, 0
      %p50 = por %p48, %p49
      %s52 = sadd.s32 %s51, 1
      %p55 = scmp.eq.s32.totalorder %s17, 1
      %p56 = scmp.ne.s32.totalorder %s51, %s53
      %p57 = scmp.eq.s32.totalorder %s17, 0
      %p58 = por %p56, %p57
      %p59 = scmp.ne.s32.totalorder %s51, %s53
      %p60 = scmp.eq.s32.totalorder %s22, 1
      %p61 = por %p59, %p60
      %p62 = scmp.ne.s32.totalorder %s53, %s54
      %p63 = scmp.eq.s32.totalorder %s22, 0
      %p64 = por %p62, %p63
      %p65 = scmp.ne.s32.totalorder %s53, %s54
      %p66 = scmp.eq.s32.totalorder %s23, 1
      %p67 = por %p65, %p66
      %p69 = scmp.ne.s32.totalorder %s54, %s68
      %p70 = scmp.eq.s32.totalorder %s23, 0
      %p71 = por %p69, %p70
      %s73 = sadd.s32 %s72, 1
      %p76 = scmp.eq.s32.totalorder %s17, 1
      %p77 = scmp.ne.s32.totalorder %s72, %s74
      %p78 = scmp.eq.s32.totalorder %s17, 0
      %p79 = por %p77, %p78
      %p80 = scmp.ne.s32.totalorder %s72, %s74
      %p81 = scmp.eq.s32.totalorder %s22, 1
      %p82 = por %p80, %p81
      %p83 = scmp.ne.s32.totalorder %s74, %s75
      %p84 = scmp.eq.s32.totalorder %s22, 0
      %p85 = por %p83, %p84
      %p86 = scmp.ne.s32.totalorder %s74, %s75
      %p87 = scmp.eq.s32.totalorder %s23, 1
      %p88 = por %p86, %p87
      %p90 = scmp.ne.s32.totalorder %s75, %s89
      %p91 = scmp.eq.s32.totalorder %s23, 0
      %p92 = por %p90, %p91
      %s94 = sadd.s32 %s93, 1
      %p97 = scmp.eq.s32.totalorder %s17, 1
      %p98 = scmp.ne.s32.totalorder %s93, %s95
      %p99 = scmp.eq.s32.totalorder %s17, 0
      %p100 = por %p98, %p99
      %p101 = scmp.ne.s32.totalorder %s93, %s95
      %p102 = scmp.eq.s32.totalorder %s22, 1
      %p103 = por %p101, %p102
      %p104 = scmp.ne.s32.totalorder %s95, %s96
      %p105 = scmp.eq.s32.totalorder %s22, 0
      %p106 = por %p104, %p105
      %p107 = scmp.ne.s32.totalorder %s95, %s96
      %p108 = scmp.eq.s32.totalorder %s23, 1
      %p109 = por %p107, %p108
      %p111 = scmp.ne.s32.totalorder %s96, %s110
      %p112 = scmp.eq.s32.totalorder %s23, 0
      %p113 = por %p111, %p112
      %s115 = sadd.s32 %s114, 1
      %p118 = scmp.eq.s32.totalorder %s17, 1
      %p119 = scmp.ne.s32.totalorder %s114, %s116
      %p120 = scmp.eq.s32.totalorder %s17, 0
      %p121 = por %p119, %p120
      %p122 = scmp.ne.s32.totalorder %s114, %s116
      %p123 = scmp.eq.s32.totalorder %s22, 1
      %p124 = por %p122, %p123
      %p125 = scmp.ne.s32.totalorder %s116, %s117
      %p126 = scmp.eq.s32.totalorder %s22, 0
      %p127 = por %p125, %p126
      %p128 = scmp.ne.s32.totalorder %s116, %s117
      %p129 = scmp.eq.s32.totalorder %s23, 1
      %p130 = por %p128, %p129
      %p132 = scmp.ne.s32.totalorder %s117, %s131
      %p133 = scmp.eq.s32.totalorder %s23, 0
      %p134 = por %p132, %p133
      %s136 = sadd.s32 %s135, 1
      %p139 = scmp.eq.s32.totalorder %s17, 1
      %p140 = scmp.ne.s32.totalorder %s135, %s137
      %p141 = scmp.eq.s32.totalorder %s17, 0
      %p142 = por %p140, %p141
      %p143 = scmp.ne.s32.totalorder %s135, %s137
      %p144 = scmp.eq.s32.totalorder %s22, 1
      %p145 = por %p143, %p144
      %p146 = scmp.ne.s32.totalorder %s137, %s138
      %p147 = scmp.eq.s32.totalorder %s22, 0
      %p148 = por %p146, %p147
      %p149 = scmp.ne.s32.totalorder %s137, %s138
      %p150 = scmp.eq.s32.totalorder %s23, 1
      %p151 = por %p149, %p150
      %p153 = scmp.ne.s32.totalorder %s138, %s152
      %p154 = scmp.eq.s32.totalorder %s23, 0
      %p155 = por %p153, %p154
      %s157 = sadd.s32 %s156, 1
      %p160 = scmp.eq.s32.totalorder %s17, 1
      %p161 = scmp.ne.s32.totalorder %s156, %s158
      %p162 = scmp.eq.s32.totalorder %s17, 0
      %p163 = por %p161, %p162
      %p164 = scmp.ne.s32.totalorder %s156, %s158
      %p165 = scmp.eq.s32.totalorder %s22, 1
      %p166 = por %p164, %p165
      %p167 = scmp.ne.s32.totalorder %s158, %s159
      %p168 = scmp.eq.s32.totalorder %s22, 0
      %p169 = por %p167, %p168
      %p170 = scmp.ne.s32.totalorder %s158, %s159
      %p171 = scmp.eq.s32.totalorder %s23, 1
      %p172 = por %p170, %p171
      %p174 = scmp.ne.s32.totalorder %s159, %s173
      %p175 = scmp.eq.s32.totalorder %s23, 0
      %p176 = por %p174, %p175
      %s178 = sadd.s32 %s177, 1
      %p181 = scmp.eq.s32.totalorder %s17, 1
      %p182 = scmp.ne.s32.totalorder %s177, %s179
      %p183 = scmp.eq.s32.totalorder %s17, 0
      %p184 = por %p182, %p183
      %p185 = scmp.ne.s32.totalorder %s177, %s179
      %p186 = scmp.eq.s32.totalorder %s22, 1
      %p187 = por %p185, %p186
      %p188 = scmp.ne.s32.totalorder %s179, %s180
      %p189 = scmp.eq.s32.totalorder %s22, 0
      %p190 = por %p188, %p189
      %p191 = scmp.ne.s32.totalorder %s179, %s180
      %p192 = scmp.eq.s32.totalorder %s23, 1
      %p193 = por %p191, %p192
      %p195 = scmp.ne.s32.totalorder %s180, %s194
      %p196 = scmp.eq.s32.totalorder %s23, 0
      %p197 = por %p195, %p196
      %s198 = ssub.s32 %s17, %s24
      %p199 = scmp.eq.s32.totalorder %s198, 0
      %s201 = sadd.s32 %s200, 1
      %s202 = scalar_select %p199, %s200, %s201
      %p205 = pneg %p199
      %p206 = scmp.eq.s32.totalorder %s17, 1
      %p207 = por %p205, %p206
      %p208 = scmp.ne.s32.totalorder %s200, %s203
      %p209 = scmp.eq.s32.totalorder %s17, 0
      %p210 = por %p208, %p209
      %p211 = scmp.ne.s32.totalorder %s200, %s203
      %p212 = scmp.eq.s32.totalorder %s22, 1
      %p213 = por %p211, %p212
      %p214 = scmp.ne.s32.totalorder %s203, %s204
      %p215 = scmp.eq.s32.totalorder %s22, 0
      %p216 = por %p214, %p215
      %p217 = scmp.ne.s32.totalorder %s203, %s204
      %p218 = scmp.eq.s32.totalorder %s23, 1
      %p219 = por %p217, %p218
      %p221 = scmp.ne.s32.totalorder %s204, %s220
      %p222 = scmp.eq.s32.totalorder %s23, 0
      %p223 = por %p221, %p222
      %p224 = scmp.le.s32.totalorder 1, %s17
      %p225 = scmp.lt.s32.totalorder %s17, 3
      %p226 = pnand %p224, %p225
      %p227 = pneg %p226
      // Predicated region
      $region9: #{tpu_custom_call.1} parent=5 // pred_check
        _
      $region10: #{tpu_custom_call.1} parent=5 // pred_check_branch
        %229 = sbr.rel (%p226) target = $region12
      $region11: #{tpu_custom_call.1} parent=5 // pred_region
        %s230 = ssub.s32 %s17, 1
        // Predicated region
        $region13: #{tpu_custom_call.1} parent=11 // pred_check
          %p231 = pneg %p64
        $region14: #{tpu_custom_call.1} parent=11 // pred_check_branch
          %233 = sbr.rel (%p231) target = $region16
        $region15: #{tpu_custom_call.1} parent=11 // pred_region
          _
        $region16: #{tpu_custom_call.1} parent=11 // pred_fallthru
          _
        // Predicated region
        $region17: #{tpu_custom_call.1} parent=11 // pred_check
          %p234 = pneg %p85
        $region18: #{tpu_custom_call.1} parent=11 // pred_check_branch
          %236 = sbr.rel (%p234) target = $region20
        $region19: #{tpu_custom_call.1} parent=11 // pred_region
          _
        $region20: #{tpu_custom_call.1} parent=11 // pred_fallthru
          _
        // Predicated region
        $region21: #{tpu_custom_call.1} parent=11 // pred_check
          %p237 = pneg %p106
        $region22: #{tpu_custom_call.1} parent=11 // pred_check_branch
          %239 = sbr.rel (%p237) target = $region24
        $region23: #{tpu_custom_call.1} parent=11 // pred_region
          _
        $region24: #{tpu_custom_call.1} parent=11 // pred_fallthru
          _
        // Predicated region
        $region25: #{tpu_custom_call.1} parent=11 // pred_check
          %p240 = pneg %p127
        $region26: #{tpu_custom_call.1} parent=11 // pred_check_branch
          %242 = sbr.rel (%p240) target = $region28
        $region27: #{tpu_custom_call.1} parent=11 // pred_region
          _
        $region28: #{tpu_custom_call.1} parent=11 // pred_fallthru
          _
        // Predicated region
        $region29: #{tpu_custom_call.1} parent=11 // pred_check
          %p243 = pneg %p148
        $region30: #{tpu_custom_call.1} parent=11 // pred_check_branch
          %245 = sbr.rel (%p243) target = $region32
        $region31: #{tpu_custom_call.1} parent=11 // pred_region
          _
        $region32: #{tpu_custom_call.1} parent=11 // pred_fallthru
          _
        // Predicated region
        $region33: #{tpu_custom_call.1} parent=11 // pred_check
          %p246 = pneg %p169
        $region34: #{tpu_custom_call.1} parent=11 // pred_check_branch
          %248 = sbr.rel (%p246) target = $region36
        $region35: #{tpu_custom_call.1} parent=11 // pred_region
          _
        $region36: #{tpu_custom_call.1} parent=11 // pred_fallthru
          _
        // Predicated region
        $region37: #{tpu_custom_call.1} parent=11 // pred_check
          %p249 = pneg %p190
        $region38: #{tpu_custom_call.1} parent=11 // pred_check_branch
          %251 = sbr.rel (%p249) target = $region40
        $region39: #{tpu_custom_call.1} parent=11 // pred_region
          _
        $region40: #{tpu_custom_call.1} parent=11 // pred_fallthru
          _
      $region12: #{tpu_custom_call.1} parent=5 // pred_fallthru
        _
      %p252 = scmp.lt.s32.totalorder %s17, 2
      // Predicated region
      $region41: #{tpu_custom_call.1} parent=5 // pred_check
        %p253 = pneg %p252
      $region42: #{tpu_custom_call.1} parent=5 // pred_check_branch
        %255 = sbr.rel (%p253) target = $region44
      $region43: #{tpu_custom_call.1} parent=5 // pred_region
        // Predicated region
        $region45: #{tpu_custom_call.1} parent=43 // pred_check
          %p256 = pneg %p37
        $region46: #{tpu_custom_call.1} parent=43 // pred_check_branch
          %258 = sbr.rel (%p256) target = $region48
        $region47: #{tpu_custom_call.1} parent=43 // pred_region
          %p259 = scmp.lt.s32.totalorder %s17, 1
          %s260 = scalar_select %p259, %s17, 1
          %s261 = smul.addr %s260, 2
          %s262 = smul.addr %s261, 8
          %s263 = scalar_lea.vmem %s0, %s262
        $region48: #{tpu_custom_call.1} parent=43 // pred_fallthru
          _
      $region44: #{tpu_custom_call.1} parent=5 // pred_fallthru
        _
      %p264 = scmp.le.s32.totalorder 1, %s17
      %p265 = scmp.lt.s32.totalorder %s17, 3
      %p266 = pnand %p264, %p265
      %p267 = pneg %p266
      // Predicated region
      $region49: #{tpu_custom_call.1} parent=5 // pred_check
        _
      $region50: #{tpu_custom_call.1} parent=5 // pred_check_branch
        %269 = sbr.rel (%p266) target = $region52
      $region51: #{tpu_custom_call.1} parent=5 // pred_region
        %s270 = ssub.s32 %s17, 1
        %p271 = scmp.lt.s32.totalorder %s22, 1
        %s272 = scalar_select %p271, %s22, 1
        %s273 = smul.addr %s272, 2
        %s274 = smul.addr %s273, 8
        %s275 = scalar_lea.vmem %s0, %s274
        %p276 = pneg %p43
        %p277 = pneg %p40
        %p278 = pneg %p64
        %p279 = pneg %p61
        %p280 = pneg %p85
        %p281 = pneg %p82
        %p282 = pneg %p106
        %p283 = pneg %p103
        %p284 = pneg %p127
        %p285 = pneg %p124
        %p286 = pneg %p148
        %p287 = pneg %p145
        %p288 = pneg %p169
        %p289 = pneg %p166
        %p290 = pneg %p190
        %p291 = pneg %p187
        %p292 = pneg %p216
        %p293 = pneg %p213
        %s294 = sand.u32 %s203, 1
        %s295 = scalar_lea.sflag [#allocation3], %s294
        %s296 = sand.u32 %s203, 1
        %s297 = smul.addr %s296, 16
        %s298 = scalar_lea.vmem [#allocation2], %s297
        %p299 = scmp.lt.s32.totalorder %s22, 1
        %s300 = scalar_select %p299, %s22, 1
        %s301 = smul.addr %s300, 2
        %s302 = smul.addr %s301, 8
        %s303 = scalar_lea.vmem %s0, %s302
        %v304 = vld [vmem:[%s303] sm:$0xff]
        %v305 = vld [vmem:[%s303 + $0x8] sm:$0xff]
        %v306 = vld [vmem:[%s1] sm:$0xff]
        %v307 = vld [vmem:[%s1 + $0x8] sm:$0xff]
        %v308 = vld [vmem:[%s1 + $0x10] sm:$0xff]
        %v309 = vld [vmem:[%s1 + $0x18] sm:$0xff]
        %v310 = vld [vmem:[%s1 + $0x20] sm:$0xff]
        %v311 = vld [vmem:[%s1 + $0x28] sm:$0xff]
        %v312 = vld [vmem:[%s1 + $0x30] sm:$0xff]
        %v313 = vld [vmem:[%s1 + $0x38] sm:$0xff]
        %v314 = vld [vmem:[%s2] sm:$0x1]
        %v316 = vlaneseq
        %v317 = vshrl.u32 %v316, 7
        %v318 = vsub.s32 0, %v317
        %v319 = vrot.slane %v314, %v318
        %vm321 = vcmask 523264
        %v323 = vsel %vm321, %v304, 0
        %v326 = vsel %vm321, %v305, 0
        %328 = vmatprep.subr.mxu0 0.0
        %329 = vmatpush1.msra.mxu0 %v306
        %330 = vmatprep.subr.mxu0 0.0
        %331 = vmatpush1.msra.mxu0 %v307
        %332 = vmatprep.subr.mxu0 0.0
        %333 = vmatpush1.msra.mxu0 %v308
        %334 = vmatprep.subr.mxu0 0.0
        %335 = vmatpush1.msra.mxu0 %v309
        %336 = vmatprep.subr.mxu0 0.0
        %337 = vmatpush1.msra.mxu0 %v310
        %338 = vmatprep.subr.mxu0 0.0
        %339 = vmatpush1.msra.mxu0 %v311
        %340 = vmatprep.subr.mxu0 0.0
        %341 = vmatpush1.msra.mxu0 %v312
        %342 = vmatprep.subr.mxu0 0.0
        %343 = vmatpush1.msra.mxu0 %v313
        %344 = vmatprep.subr.mxu0 0.0
        %345 = vmatpush1.msra.mxu0 0.0
        %346 = vmatprep.subr.mxu0 0.0
        %347 = vmatpush1.msra.mxu0 0.0
        %348 = vmatprep.subr.mxu0 0.0
        %349 = vmatpush1.msra.mxu0 0.0
        %350 = vmatprep.subr.mxu0 0.0
        %351 = vmatpush1.msra.mxu0 0.0
        %352 = vmatprep.subr.mxu0 0.0
        %353 = vmatpush1.msra.mxu0 0.0
        %354 = vmatprep.subr.mxu0 0.0
        %355 = vmatpush1.msra.mxu0 0.0
        %356 = vmatprep.subr.mxu0 0.0
        %357 = vmatpush1.msra.mxu0 0.0
        %358 = vmatprep.subr.mxu0 0.0
        %359 = vmatpush1.msra.mxu0 0.0
        %360 = vmatprep.subr.mxu0 0.0
        %361 = vmatpush1.msra.mxu0 0.0
        %362 = vmatprep.subr.mxu0 0.0
        %363 = vmatpush1.msra.mxu0 0.0
        %364 = vmatprep.subr.mxu0 0.0
        %365 = vmatpush1.msra.mxu0 0.0
        %366 = vmatprep.subr.mxu0 0.0
        %367 = vmatpush1.msra.mxu0 0.0
        %368 = vmatprep.subr.mxu0 0.0
        %369 = vmatpush1.msra.mxu0 0.0
        %370 = vmatprep.subr.mxu0 0.0
        %371 = vmatpush1.msra.mxu0 0.0
        %372 = vmatprep.subr.mxu0 0.0
        %373 = vmatpush1.msra.mxu0 0.0
        %374 = vmatprep.subr.mxu0 0.0
        %375 = vmatpush1.msra.mxu0 0.0
        %376 = vmatprep.subr.mxu0 0.0
        %377 = vmatpush1.msra.mxu0 0.0
        %378 = vmatprep.subr.mxu0 0.0
        %379 = vmatpush1.msra.mxu0 0.0
        %380 = vmatprep.subr.mxu0 0.0
        %381 = vmatpush1.msra.mxu0 0.0
        %382 = vmatprep.subr.mxu0 0.0
        %383 = vmatpush1.msra.mxu0 0.0
        %384 = vmatprep.subr.mxu0 0.0
        %385 = vmatpush1.msra.mxu0 0.0
        %386 = vmatprep.subr.mxu0 0.0
        %387 = vmatpush1.msra.mxu0 0.0
        %388 = vmatprep.subr.mxu0 0.0
        %389 = vmatpush1.msra.mxu0 0.0
        %390 = vmatprep.subr.mxu0 0.0
        %391 = vmatpush1.msra.mxu0 0.0
        %392 = vmatprep.mubr.f32.mxu0 0.0
        %393 = vmatmul.mubr.f32.gmra.mrb[0].mxu0 %v323
        %v394 = vpop.f32.mrb[0].mxu0
        %v395 = vadd.f32 %v319, %v394
        %v396 = vpop.f32.mrb[0].mxu0
        %397 = vmatprep.mubr.f32.mxu0 0.0
        %398 = vmatmul.mubr.f32.gmra.mrb[0].mxu0 %v326
        %v399 = vpop.f32.mrb[0].mxu0
        %v400 = vadd.f32 %v319, %v399
        %v401 = vpop.f32.mrb[0].mxu0
        %402 = vdwg.mxu0
        %v403 = vld [vmem:[%s3] sm:$0xff]
        %v404 = vld [vmem:[%s3 + $0x8] sm:$0xff]
        %v405 = vld [vmem:[%s3 + $0x10] sm:$0xff]
        %v406 = vld [vmem:[%s3 + $0x18] sm:$0xff]
        %v407 = vld [vmem:[%s3 + $0x20] sm:$0xff]
        %v408 = vld [vmem:[%s3 + $0x28] sm:$0xff]
        %v409 = vld [vmem:[%s3 + $0x30] sm:$0xff]
        %v410 = vld [vmem:[%s3 + $0x38] sm:$0xff]
        %v411 = vld [vmem:[%s3 + $0x40] sm:$0xff]
        %v412 = vld [vmem:[%s3 + $0x48] sm:$0xff]
        %v413 = vld [vmem:[%s3 + $0x50] sm:$0xff]
        %v414 = vld [vmem:[%s3 + $0x58] sm:$0xff]
        %v415 = vld [vmem:[%s3 + $0x60] sm:$0xff]
        %v416 = vld [vmem:[%s3 + $0x68] sm:$0xff]
        %v417 = vld [vmem:[%s3 + $0x70] sm:$0xff]
        %v418 = vld [vmem:[%s3 + $0x78] sm:$0xff]
        %v419 = vld [vmem:[%s3 + $0x80] sm:$0xff]
        %v420 = vld [vmem:[%s3 + $0x88] sm:$0xff]
        %v421 = vld [vmem:[%s3 + $0x90] sm:$0xff]
        %v422 = vld [vmem:[%s3 + $0x98] sm:$0xff]
        %v423 = vld [vmem:[%s3 + $0xa0] sm:$0xff]
        %v424 = vld [vmem:[%s3 + $0xa8] sm:$0xff]
        %v425 = vld [vmem:[%s3 + $0xb0] sm:$0xff]
        %v426 = vld [vmem:[%s3 + $0xb8] sm:$0xff]
        %v427 = vld [vmem:[%s3 + $0xc0] sm:$0xff]
        %v428 = vld [vmem:[%s3 + $0xc8] sm:$0xff]
        %v429 = vld [vmem:[%s3 + $0xd0] sm:$0xff]
        %v430 = vld [vmem:[%s3 + $0xd8] sm:$0xff]
        %v431 = vld [vmem:[%s3 + $0xe0] sm:$0xff]
        %v432 = vld [vmem:[%s3 + $0xe8] sm:$0xff]
        %v433 = vld [vmem:[%s3 + $0xf0] sm:$0xff]
        %v434 = vld [vmem:[%s3 + $0xf8] sm:$0xff]
        %v435 = vld [vmem:[%s3 + $0x100] sm:$0xff]
        %v436 = vld [vmem:[%s3 + $0x108] sm:$0xff]
        %v437 = vld [vmem:[%s3 + $0x110] sm:$0xff]
        %v438 = vld [vmem:[%s3 + $0x118] sm:$0xff]
        %v439 = vld [vmem:[%s3 + $0x120] sm:$0xff]
        %v440 = vld [vmem:[%s3 + $0x128] sm:$0xff]
        %v441 = vld [vmem:[%s3 + $0x130] sm:$0xff]
        %v442 = vld [vmem:[%s3 + $0x138] sm:$0xff]
        %v443 = vld [vmem:[%s3 + $0x140] sm:$0xff]
        %v444 = vld [vmem:[%s3 + $0x148] sm:$0xff]
        %v445 = vld [vmem:[%s3 + $0x150] sm:$0xff]
        %v446 = vld [vmem:[%s3 + $0x158] sm:$0xff]
        %v447 = vld [vmem:[%s3 + $0x160] sm:$0xff]
        %v448 = vld [vmem:[%s3 + $0x168] sm:$0xff]
        %v449 = vld [vmem:[%s3 + $0x170] sm:$0xff]
        %v450 = vld [vmem:[%s3 + $0x178] sm:$0xff]
        %v451 = vld [vmem:[%s3 + $0x180] sm:$0xff]
        %v452 = vld [vmem:[%s3 + $0x188] sm:$0xff]
        %v453 = vld [vmem:[%s3 + $0x190] sm:$0xff]
        %v454 = vld [vmem:[%s3 + $0x198] sm:$0xff]
        %v455 = vld [vmem:[%s3 + $0x1a0] sm:$0xff]
        %v456 = vld [vmem:[%s3 + $0x1a8] sm:$0xff]
        %v457 = vld [vmem:[%s3 + $0x1b0] sm:$0xff]
        %v458 = vld [vmem:[%s3 + $0x1b8] sm:$0xff]
        %v459 = vld [vmem:[%s3 + $0x1c0] sm:$0xff]
        %v460 = vld [vmem:[%s3 + $0x1c8] sm:$0xff]
        %v461 = vld [vmem:[%s3 + $0x1d0] sm:$0xff]
        %v462 = vld [vmem:[%s3 + $0x1d8] sm:$0xff]
        %v463 = vld [vmem:[%s3 + $0x1e0] sm:$0xff]
        %v464 = vld [vmem:[%s3 + $0x1e8] sm:$0xff]
        %v465 = vld [vmem:[%s3 + $0x1f0] sm:$0xff]
        %v466 = vld [vmem:[%s3 + $0x1f8] sm:$0xff]
        %467 = vmatprep.subr.mxu0 0.0
        %468 = vmatpush1.msra.mxu0 %v403
        %469 = vmatprep.subr.mxu0 0.0
        %470 = vmatpush1.msra.mxu0 %v404
        %471 = vmatprep.subr.mxu0 0.0
        %472 = vmatpush1.msra.mxu0 %v405
        %473 = vmatprep.subr.mxu0 0.0
        %474 = vmatpush1.msra.mxu0 %v406
        %475 = vmatprep.subr.mxu0 0.0
        %476 = vmatpush1.msra.mxu0 %v407
        %477 = vmatprep.subr.mxu0 0.0
        %478 = vmatpush1.msra.mxu0 %v408
        %479 = vmatprep.subr.mxu0 0.0
        %480 = vmatpush1.msra.mxu0 %v409
        %481 = vmatprep.subr.mxu0 0.0
        %482 = vmatpush1.msra.mxu0 %v410
        %483 = vmatprep.subr.mxu0 0.0
        %484 = vmatpush1.msra.mxu0 %v411
        %485 = vmatprep.subr.mxu0 0.0
        %486 = vmatpush1.msra.mxu0 %v412
        %487 = vmatprep.subr.mxu0 0.0
        %488 = vmatpush1.msra.mxu0 %v413
        %489 = vmatprep.subr.mxu0 0.0
        %490 = vmatpush1.msra.mxu0 %v414
        %491 = vmatprep.subr.mxu0 0.0
        %492 = vmatpush1.msra.mxu0 %v415
        %493 = vmatprep.subr.mxu0 0.0
        %494 = vmatpush1.msra.mxu0 %v416
        %495 = vmatprep.subr.mxu0 0.0
        %496 = vmatpush1.msra.mxu0 %v417
        %497 = vmatprep.subr.mxu0 0.0
        %498 = vmatpush1.msra.mxu0 %v418
        %499 = vmatprep.subr.mxu0 0.0
        %500 = vmatpush1.msra.mxu0 0.0
        %501 = vmatprep.subr.mxu0 0.0
        %502 = vmatpush1.msra.mxu0 0.0
        %503 = vmatprep.subr.mxu0 0.0
        %504 = vmatpush1.msra.mxu0 0.0
        %505 = vmatprep.subr.mxu0 0.0
        %506 = vmatpush1.msra.mxu0 0.0
        %507 = vmatprep.subr.mxu0 0.0
        %508 = vmatpush1.msra.mxu0 0.0
        %509 = vmatprep.subr.mxu0 0.0
        %510 = vmatpush1.msra.mxu0 0.0
        %511 = vmatprep.subr.mxu0 0.0
        %512 = vmatpush1.msra.mxu0 0.0
        %513 = vmatprep.subr.mxu0 0.0
        %514 = vmatpush1.msra.mxu0 0.0
        %515 = vmatprep.subr.mxu0 0.0
        %516 = vmatpush1.msra.mxu0 0.0
        %517 = vmatprep.subr.mxu0 0.0
        %518 = vmatpush1.msra.mxu0 0.0
        %519 = vmatprep.subr.mxu0 0.0
        %520 = vmatpush1.msra.mxu0 0.0
        %521 = vmatprep.subr.mxu0 0.0
        %522 = vmatpush1.msra.mxu0 0.0
        %523 = vmatprep.subr.mxu0 0.0
        %524 = vmatpush1.msra.mxu0 0.0
        %525 = vmatprep.subr.mxu0 0.0
        %526 = vmatpush1.msra.mxu0 0.0
        %527 = vmatprep.subr.mxu0 0.0
        %528 = vmatpush1.msra.mxu0 0.0
        %529 = vmatprep.subr.mxu0 0.0
        %530 = vmatpush1.msra.mxu0 0.0
        %531 = vmatprep.mubr.f32.mxu0 0.0
        %532 = vmatmul.mubr.f32.gmra.mrb[0].mxu0 %v395
        %v533 = vpop.f32.mrb[0].mxu0
        %v534 = vadd.f32 0.0, %v533
        %v535 = vpop.f32.mrb[0].mxu0
        %536 = vmatprep.mubr.f32.mxu0 0.0
        %537 = vmatmul.mubr.f32.gmra.mrb[0].mxu0 %v400
        %v538 = vpop.f32.mrb[0].mxu0
        %v539 = vadd.f32 0.0, %v538
        %v540 = vpop.f32.mrb[0].mxu0
        %541 = vdwg.mxu0
        %542 = vmatprep.subr.mxu0 0.0
        %543 = vmatpush1.msra.mxu0 %v419
        %544 = vmatprep.subr.mxu0 0.0
        %545 = vmatpush1.msra.mxu0 %v420
        %546 = vmatprep.subr.mxu0 0.0
        %547 = vmatpush1.msra.mxu0 %v421
        %548 = vmatprep.subr.mxu0 0.0
        %549 = vmatpush1.msra.mxu0 %v422
        %550 = vmatprep.subr.mxu0 0.0
        %551 = vmatpush1.msra.mxu0 %v423
        %552 = vmatprep.subr.mxu0 0.0
        %553 = vmatpush1.msra.mxu0 %v424
        %554 = vmatprep.subr.mxu0 0.0
        %555 = vmatpush1.msra.mxu0 %v425
        %556 = vmatprep.subr.mxu0 0.0
        %557 = vmatpush1.msra.mxu0 %v426
        %558 = vmatprep.subr.mxu0 0.0
        %559 = vmatpush1.msra.mxu0 %v427
        %560 = vmatprep.subr.mxu0 0.0
        %561 = vmatpush1.msra.mxu0 %v428
        %562 = vmatprep.subr.mxu0 0.0
        %563 = vmatpush1.msra.mxu0 %v429
        %564 = vmatprep.subr.mxu0 0.0
        %565 = vmatpush1.msra.mxu0 %v430
        %566 = vmatprep.subr.mxu0 0.0
        %567 = vmatpush1.msra.mxu0 %v431
        %568 = vmatprep.subr.mxu0 0.0
        %569 = vmatpush1.msra.mxu0 %v432
        %570 = vmatprep.subr.mxu0 0.0
        %571 = vmatpush1.msra.mxu0 %v433
        %572 = vmatprep.subr.mxu0 0.0
        %573 = vmatpush1.msra.mxu0 %v434
        %574 = vmatprep.subr.mxu0 0.0
        %575 = vmatpush1.msra.mxu0 0.0
        %576 = vmatprep.subr.mxu0 0.0
        %577 = vmatpush1.msra.mxu0 0.0
        %578 = vmatprep.subr.mxu0 0.0
        %579 = vmatpush1.msra.mxu0 0.0
        %580 = vmatprep.subr.mxu0 0.0
        %581 = vmatpush1.msra.mxu0 0.0
        %582 = vmatprep.subr.mxu0 0.0
        %583 = vmatpush1.msra.mxu0 0.0
        %584 = vmatprep.subr.mxu0 0.0
        %585 = vmatpush1.msra.mxu0 0.0
        %586 = vmatprep.subr.mxu0 0.0
        %587 = vmatpush1.msra.mxu0 0.0
        %588 = vmatprep.subr.mxu0 0.0
        %589 = vmatpush1.msra.mxu0 0.0
        %590 = vmatprep.subr.mxu0 0.0
        %591 = vmatpush1.msra.mxu0 0.0
        %592 = vmatprep.subr.mxu0 0.0
        %593 = vmatpush1.msra.mxu0 0.0
        %594 = vmatprep.subr.mxu0 0.0
        %595 = vmatpush1.msra.mxu0 0.0
        %596 = vmatprep.subr.mxu0 0.0
        %597 = vmatpush1.msra.mxu0 0.0
        %598 = vmatprep.subr.mxu0 0.0
        %599 = vmatpush1.msra.mxu0 0.0
        %600 = vmatprep.subr.mxu0 0.0
        %601 = vmatpush1.msra.mxu0 0.0
        %602 = vmatprep.subr.mxu0 0.0
        %603 = vmatpush1.msra.mxu0 0.0
        %604 = vmatprep.subr.mxu0 0.0
        %605 = vmatpush1.msra.mxu0 0.0
        %606 = vmatprep.mubr.f32.mxu0 0.0
        %607 = vmatmul.mubr.f32.gmra.mrb[0].mxu0 %v395
        %v608 = vpop.f32.mrb[0].mxu0
        %v609 = vadd.f32 0.0, %v608
        %v610 = vpop.f32.mrb[0].mxu0
        %611 = vmatprep.mubr.f32.mxu0 0.0
        %612 = vmatmul.mubr.f32.gmra.mrb[0].mxu0 %v400
        %v613 = vpop.f32.mrb[0].mxu0
        %v614 = vadd.f32 0.0, %v613
        %v615 = vpop.f32.mrb[0].mxu0
        %616 = vdwg.mxu0
        %617 = vmatprep.subr.mxu0 0.0
        %618 = vmatpush1.msra.mxu0 %v435
        %619 = vmatprep.subr.mxu0 0.0
        %620 = vmatpush1.msra.mxu0 %v436
        %621 = vmatprep.subr.mxu0 0.0
        %622 = vmatpush1.msra.mxu0 %v437
        %623 = vmatprep.subr.mxu0 0.0
        %624 = vmatpush1.msra.mxu0 %v438
        %625 = vmatprep.subr.mxu0 0.0
        %626 = vmatpush1.msra.mxu0 %v439
        %627 = vmatprep.subr.mxu0 0.0
        %628 = vmatpush1.msra.mxu0 %v440
        %629 = vmatprep.subr.mxu0 0.0
        %630 = vmatpush1.msra.mxu0 %v441
        %631 = vmatprep.subr.mxu0 0.0
        %632 = vmatpush1.msra.mxu0 %v442
        %633 = vmatprep.subr.mxu0 0.0
        %634 = vmatpush1.msra.mxu0 %v443
        %635 = vmatprep.subr.mxu0 0.0
        %636 = vmatpush1.msra.mxu0 %v444
        %637 = vmatprep.subr.mxu0 0.0
        %638 = vmatpush1.msra.mxu0 %v445
        %639 = vmatprep.subr.mxu0 0.0
        %640 = vmatpush1.msra.mxu0 %v446
        %641 = vmatprep.subr.mxu0 0.0
        %642 = vmatpush1.msra.mxu0 %v447
        %643 = vmatprep.subr.mxu0 0.0
        %644 = vmatpush1.msra.mxu0 %v448
        %645 = vmatprep.subr.mxu0 0.0
        %646 = vmatpush1.msra.mxu0 %v449
        %647 = vmatprep.subr.mxu0 0.0
        %648 = vmatpush1.msra.mxu0 %v450
        %649 = vmatprep.subr.mxu0 0.0
        %650 = vmatpush1.msra.mxu0 0.0
        %651 = vmatprep.subr.mxu0 0.0
        %652 = vmatpush1.msra.mxu0 0.0
        %653 = vmatprep.subr.mxu0 0.0
        %654 = vmatpush1.msra.mxu0 0.0
        %655 = vmatprep.subr.mxu0 0.0
        %656 = vmatpush1.msra.mxu0 0.0
        %657 = vmatprep.subr.mxu0 0.0
        %658 = vmatpush1.msra.mxu0 0.0
        %659 = vmatprep.subr.mxu0 0.0
        %660 = vmatpush1.msra.mxu0 0.0
        %661 = vmatprep.subr.mxu0 0.0
        %662 = vmatpush1.msra.mxu0 0.0
        %663 = vmatprep.subr.mxu0 0.0
        %664 = vmatpush1.msra.mxu0 0.0
        %665 = vmatprep.subr.mxu0 0.0
        %666 = vmatpush1.msra.mxu0 0.0
        %667 = vmatprep.subr.mxu0 0.0
        %668 = vmatpush1.msra.mxu0 0.0
        %669 = vmatprep.subr.mxu0 0.0
        %670 = vmatpush1.msra.mxu0 0.0
        %671 = vmatprep.subr.mxu0 0.0
        %672 = vmatpush1.msra.mxu0 0.0
        %673 = vmatprep.subr.mxu0 0.0
        %674 = vmatpush1.msra.mxu0 0.0
        %675 = vmatprep.subr.mxu0 0.0
        %676 = vmatpush1.msra.mxu0 0.0
        %677 = vmatprep.subr.mxu0 0.0
        %678 = vmatpush1.msra.mxu0 0.0
        %679 = vmatprep.subr.mxu0 0.0
        %680 = vmatpush1.msra.mxu0 0.0
        %681 = vmatprep.mubr.f32.mxu0 0.0
        %682 = vmatmul.mubr.f32.gmra.mrb[0].mxu0 %v395
        %v683 = vpop.f32.mrb[0].mxu0
        %v684 = vadd.f32 0.0, %v683
        %v685 = vpop.f32.mrb[0].mxu0
        %686 = vmatprep.mubr.f32.mxu0 0.0
        %687 = vmatmul.mubr.f32.gmra.mrb[0].mxu0 %v400
        %v688 = vpop.f32.mrb[0].mxu0
        %v689 = vadd.f32 0.0, %v688
        %v690 = vpop.f32.mrb[0].mxu0
        %691 = vdwg.mxu0
        %692 = vmatprep.subr.mxu0 0.0
        %693 = vmatpush1.msra.mxu0 %v451
        %694 = vmatprep.subr.mxu0 0.0
        %695 = vmatpush1.msra.mxu0 %v452
        %696 = vmatprep.subr.mxu0 0.0
        %697 = vmatpush1.msra.mxu0 %v453
        %698 = vmatprep.subr.mxu0 0.0
        %699 = vmatpush1.msra.mxu0 %v454
        %700 = vmatprep.subr.mxu0 0.0
        %701 = vmatpush1.msra.mxu0 %v455
        %702 = vmatprep.subr.mxu0 0.0
        %703 = vmatpush1.msra.mxu0 %v456
        %704 = vmatprep.subr.mxu0 0.0
        %705 = vmatpush1.msra.mxu0 %v457
        %706 = vmatprep.subr.mxu0 0.0
        %707 = vmatpush1.msra.mxu0 %v458
        %708 = vmatprep.subr.mxu0 0.0
        %709 = vmatpush1.msra.mxu0 %v459
        %710 = vmatprep.subr.mxu0 0.0
        %711 = vmatpush1.msra.mxu0 %v460
        %712 = vmatprep.subr.mxu0 0.0
        %713 = vmatpush1.msra.mxu0 %v461
        %714 = vmatprep.subr.mxu0 0.0
        %715 = vmatpush1.msra.mxu0 %v462
        %716 = vmatprep.subr.mxu0 0.0
        %717 = vmatpush1.msra.mxu0 %v463
        %718 = vmatprep.subr.mxu0 0.0
        %719 = vmatpush1.msra.mxu0 %v464
        %720 = vmatprep.subr.mxu0 0.0
        %721 = vmatpush1.msra.mxu0 %v465
        %722 = vmatprep.subr.mxu0 0.0
        %723 = vmatpush1.msra.mxu0 %v466
        %724 = vmatprep.subr.mxu0 0.0
        %725 = vmatpush1.msra.mxu0 0.0
        %726 = vmatprep.subr.mxu0 0.0
        %727 = vmatpush1.msra.mxu0 0.0
        %728 = vmatprep.subr.mxu0 0.0
        %729 = vmatpush1.msra.mxu0 0.0
        %730 = vmatprep.subr.mxu0 0.0
        %731 = vmatpush1.msra.mxu0 0.0
        %732 = vmatprep.subr.mxu0 0.0
        %733 = vmatpush1.msra.mxu0 0.0
        %734 = vmatprep.subr.mxu0 0.0
        %735 = vmatpush1.msra.mxu0 0.0
        %736 = vmatprep.subr.mxu0 0.0
        %737 = vmatpush1.msra.mxu0 0.0
        %738 = vmatprep.subr.mxu0 0.0
        %739 = vmatpush1.msra.mxu0 0.0
        %740 = vmatprep.subr.mxu0 0.0
        %741 = vmatpush1.msra.mxu0 0.0
        %742 = vmatprep.subr.mxu0 0.0
        %743 = vmatpush1.msra.mxu0 0.0
        %744 = vmatprep.subr.mxu0 0.0
        %745 = vmatpush1.msra.mxu0 0.0
        %746 = vmatprep.subr.mxu0 0.0
        %747 = vmatpush1.msra.mxu0 0.0
        %748 = vmatprep.subr.mxu0 0.0
        %749 = vmatpush1.msra.mxu0 0.0
        %750 = vmatprep.subr.mxu0 0.0
        %751 = vmatpush1.msra.mxu0 0.0
        %752 = vmatprep.subr.mxu0 0.0
        %753 = vmatpush1.msra.mxu0 0.0
        %754 = vmatprep.subr.mxu0 0.0
        %755 = vmatpush1.msra.mxu0 0.0
        %756 = vmatprep.mubr.f32.mxu0 0.0
        %757 = vmatmul.mubr.f32.gmra.mrb[0].mxu0 %v395
        %v758 = vpop.f32.mrb[0].mxu0
        %v759 = vadd.f32 0.0, %v758
        %v760 = vpop.f32.mrb[0].mxu0
        %761 = vmatprep.mubr.f32.mxu0 0.0
        %762 = vmatmul.mubr.f32.gmra.mrb[0].mxu0 %v400
        %v763 = vpop.f32.mrb[0].mxu0
        %v764 = vadd.f32 0.0, %v763
        %v765 = vpop.f32.mrb[0].mxu0
        %766 = vdwg.mxu0
        %v767 = vld [vmem:[%s4] sm:$0xff]
        %v768 = vld [vmem:[%s4 + $0x8] sm:$0xff]
        %v769 = vld [vmem:[%s4 + $0x10] sm:$0xff]
        %v770 = vld [vmem:[%s4 + $0x18] sm:$0xff]
        %v771 = vld [vmem:[%s4 + $0x20] sm:$0xff]
        %v772 = vld [vmem:[%s4 + $0x28] sm:$0xff]
        %v773 = vld [vmem:[%s4 + $0x30] sm:$0xff]
        %v774 = vld [vmem:[%s4 + $0x38] sm:$0xff]
        %v775 = vld [vmem:[%s4 + $0x40] sm:$0xff]
        %v776 = vld [vmem:[%s4 + $0x48] sm:$0xff]
        %v777 = vld [vmem:[%s4 + $0x50] sm:$0xff]
        %v778 = vld [vmem:[%s4 + $0x58] sm:$0xff]
        %v779 = vld [vmem:[%s4 + $0x60] sm:$0xff]
        %v780 = vld [vmem:[%s4 + $0x68] sm:$0xff]
        %v781 = vld [vmem:[%s4 + $0x70] sm:$0xff]
        %v782 = vld [vmem:[%s4 + $0x78] sm:$0xff]
        %v783 = vld [vmem:[%s4 + $0x80] sm:$0xff]
        %v784 = vld [vmem:[%s4 + $0x88] sm:$0xff]
        %v785 = vld [vmem:[%s4 + $0x90] sm:$0xff]
        %v786 = vld [vmem:[%s4 + $0x98] sm:$0xff]
        %v787 = vld [vmem:[%s4 + $0xa0] sm:$0xff]
        %v788 = vld [vmem:[%s4 + $0xa8] sm:$0xff]
        %v789 = vld [vmem:[%s4 + $0xb0] sm:$0xff]
        %v790 = vld [vmem:[%s4 + $0xb8] sm:$0xff]
        %v791 = vld [vmem:[%s4 + $0xc0] sm:$0xff]
        %v792 = vld [vmem:[%s4 + $0xc8] sm:$0xff]
        %v793 = vld [vmem:[%s4 + $0xd0] sm:$0xff]
        %v794 = vld [vmem:[%s4 + $0xd8] sm:$0xff]
        %v795 = vld [vmem:[%s4 + $0xe0] sm:$0xff]
        %v796 = vld [vmem:[%s4 + $0xe8] sm:$0xff]
        %v797 = vld [vmem:[%s4 + $0xf0] sm:$0xff]
        %v798 = vld [vmem:[%s4 + $0xf8] sm:$0xff]
        %v799 = vld [vmem:[%s4 + $0x100] sm:$0xff]
        %v800 = vld [vmem:[%s4 + $0x108] sm:$0xff]
        %v801 = vld [vmem:[%s4 + $0x110] sm:$0xff]
        %v802 = vld [vmem:[%s4 + $0x118] sm:$0xff]
        %v803 = vld [vmem:[%s4 + $0x120] sm:$0xff]
        %v804 = vld [vmem:[%s4 + $0x128] sm:$0xff]
        %v805 = vld [vmem:[%s4 + $0x130] sm:$0xff]
        %v806 = vld [vmem:[%s4 + $0x138] sm:$0xff]
        %v807 = vld [vmem:[%s4 + $0x140] sm:$0xff]
        %v808 = vld [vmem:[%s4 + $0x148] sm:$0xff]
        %v809 = vld [vmem:[%s4 + $0x150] sm:$0xff]
        %v810 = vld [vmem:[%s4 + $0x158] sm:$0xff]
        %v811 = vld [vmem:[%s4 + $0x160] sm:$0xff]
        %v812 = vld [vmem:[%s4 + $0x168] sm:$0xff]
        %v813 = vld [vmem:[%s4 + $0x170] sm:$0xff]
        %v814 = vld [vmem:[%s4 + $0x178] sm:$0xff]
        %v815 = vld [vmem:[%s4 + $0x180] sm:$0xff]
        %v816 = vld [vmem:[%s4 + $0x188] sm:$0xff]
        %v817 = vld [vmem:[%s4 + $0x190] sm:$0xff]
        %v818 = vld [vmem:[%s4 + $0x198] sm:$0xff]
        %v819 = vld [vmem:[%s4 + $0x1a0] sm:$0xff]
        %v820 = vld [vmem:[%s4 + $0x1a8] sm:$0xff]
        %v821 = vld [vmem:[%s4 + $0x1b0] sm:$0xff]
        %v822 = vld [vmem:[%s4 + $0x1b8] sm:$0xff]
        %v823 = vld [vmem:[%s4 + $0x1c0] sm:$0xff]
        %v824 = vld [vmem:[%s4 + $0x1c8] sm:$0xff]
        %v825 = vld [vmem:[%s4 + $0x1d0] sm:$0xff]
        %v826 = vld [vmem:[%s4 + $0x1d8] sm:$0xff]
        %v827 = vld [vmem:[%s4 + $0x1e0] sm:$0xff]
        %v828 = vld [vmem:[%s4 + $0x1e8] sm:$0xff]
        %v829 = vld [vmem:[%s4 + $0x1f0] sm:$0xff]
        %v830 = vld [vmem:[%s4 + $0x1f8] sm:$0xff]
        %831 = vmatprep.subr.mxu0 0.0
        %832 = vmatpush1.msra.mxu0 %v767
        %833 = vmatprep.subr.mxu0 0.0
        %834 = vmatpush1.msra.mxu0 %v768
        %835 = vmatprep.subr.mxu0 0.0
        %836 = vmatpush1.msra.mxu0 %v769
        %837 = vmatprep.subr.mxu0 0.0
        %838 = vmatpush1.msra.mxu0 %v770
        %839 = vmatprep.subr.mxu0 0.0
        %840 = vmatpush1.msra.mxu0 %v771
        %841 = vmatprep.subr.mxu0 0.0
        %842 = vmatpush1.msra.mxu0 %v772
        %843 = vmatprep.subr.mxu0 0.0
        %844 = vmatpush1.msra.mxu0 %v773
        %845 = vmatprep.subr.mxu0 0.0
        %846 = vmatpush1.msra.mxu0 %v774
        %847 = vmatprep.subr.mxu0 0.0
        %848 = vmatpush1.msra.mxu0 %v775
        %849 = vmatprep.subr.mxu0 0.0
        %850 = vmatpush1.msra.mxu0 %v776
        %851 = vmatprep.subr.mxu0 0.0
        %852 = vmatpush1.msra.mxu0 %v777
        %853 = vmatprep.subr.mxu0 0.0
        %854 = vmatpush1.msra.mxu0 %v778
        %855 = vmatprep.subr.mxu0 0.0
        %856 = vmatpush1.msra.mxu0 %v779
        %857 = vmatprep.subr.mxu0 0.0
        %858 = vmatpush1.msra.mxu0 %v780
        %859 = vmatprep.subr.mxu0 0.0
        %860 = vmatpush1.msra.mxu0 %v781
        %861 = vmatprep.subr.mxu0 0.0
        %862 = vmatpush1.msra.mxu0 %v782
        %863 = vmatprep.subr.mxu0 0.0
        %864 = vmatpush1.msra.mxu0 0.0
        %865 = vmatprep.subr.mxu0 0.0
        %866 = vmatpush1.msra.mxu0 0.0
        %867 = vmatprep.subr.mxu0 0.0
        %868 = vmatpush1.msra.mxu0 0.0
        %869 = vmatprep.subr.mxu0 0.0
        %870 = vmatpush1.msra.mxu0 0.0
        %871 = vmatprep.subr.mxu0 0.0
        %872 = vmatpush1.msra.mxu0 0.0
        %873 = vmatprep.subr.mxu0 0.0
        %874 = vmatpush1.msra.mxu0 0.0
        %875 = vmatprep.subr.mxu0 0.0
        %876 = vmatpush1.msra.mxu0 0.0
        %877 = vmatprep.subr.mxu0 0.0
        %878 = vmatpush1.msra.mxu0 0.0
        %879 = vmatprep.subr.mxu0 0.0
        %880 = vmatpush1.msra.mxu0 0.0
        %881 = vmatprep.subr.mxu0 0.0
        %882 = vmatpush1.msra.mxu0 0.0
        %883 = vmatprep.subr.mxu0 0.0
        %884 = vmatpush1.msra.mxu0 0.0
        %885 = vmatprep.subr.mxu0 0.0
        %886 = vmatpush1.msra.mxu0 0.0
        %887 = vmatprep.subr.mxu0 0.0
        %888 = vmatpush1.msra.mxu0 0.0
        %889 = vmatprep.subr.mxu0 0.0
        %890 = vmatpush1.msra.mxu0 0.0
        %891 = vmatprep.subr.mxu0 0.0
        %892 = vmatpush1.msra.mxu0 0.0
        %893 = vmatprep.subr.mxu0 0.0
        %894 = vmatpush1.msra.mxu0 0.0
        %895 = vmatprep.mubr.f32.mxu0 0.0
        %896 = vmatmul.mubr.f32.gmra.mrb[0].mxu0 %v395
        %v897 = vpop.f32.mrb[0].mxu0
        %v898 = vadd.f32 0.0, %v897
        %v899 = vpop.f32.mrb[0].mxu0
        %900 = vmatprep.mubr.f32.mxu0 0.0
        %901 = vmatmul.mubr.f32.gmra.mrb[0].mxu0 %v400
        %v902 = vpop.f32.mrb[0].mxu0
        %v903 = vadd.f32 0.0, %v902
        %v904 = vpop.f32.mrb[0].mxu0
        %905 = vdwg.mxu0
        %906 = vmatprep.subr.mxu0 0.0
        %907 = vmatpush1.msra.mxu0 %v783
        %908 = vmatprep.subr.mxu0 0.0
        %909 = vmatpush1.msra.mxu0 %v784
        %910 = vmatprep.subr.mxu0 0.0
        %911 = vmatpush1.msra.mxu0 %v785
        %912 = vmatprep.subr.mxu0 0.0
        %913 = vmatpush1.msra.mxu0 %v786
        %914 = vmatprep.subr.mxu0 0.0
        %915 = vmatpush1.msra.mxu0 %v787
        %916 = vmatprep.subr.mxu0 0.0
        %917 = vmatpush1.msra.mxu0 %v788
        %918 = vmatprep.subr.mxu0 0.0
        %919 = vmatpush1.msra.mxu0 %v789
        %920 = vmatprep.subr.mxu0 0.0
        %921 = vmatpush1.msra.mxu0 %v790
        %922 = vmatprep.subr.mxu0 0.0
        %923 = vmatpush1.msra.mxu0 %v791
        %924 = vmatprep.subr.mxu0 0.0
        %925 = vmatpush1.msra.mxu0 %v792
        %926 = vmatprep.subr.mxu0 0.0
        %927 = vmatpush1.msra.mxu0 %v793
        %928 = vmatprep.subr.mxu0 0.0
        %929 = vmatpush1.msra.mxu0 %v794
        %930 = vmatprep.subr.mxu0 0.0
        %931 = vmatpush1.msra.mxu0 %v795
        %932 = vmatprep.subr.mxu0 0.0
        %933 = vmatpush1.msra.mxu0 %v796
        %934 = vmatprep.subr.mxu0 0.0
        %935 = vmatpush1.msra.mxu0 %v797
        %936 = vmatprep.subr.mxu0 0.0
        %937 = vmatpush1.msra.mxu0 %v798
        %938 = vmatprep.subr.mxu0 0.0
        %939 = vmatpush1.msra.mxu0 0.0
        %940 = vmatprep.subr.mxu0 0.0
        %941 = vmatpush1.msra.mxu0 0.0
        %942 = vmatprep.subr.mxu0 0.0
        %943 = vmatpush1.msra.mxu0 0.0
        %944 = vmatprep.subr.mxu0 0.0
        %945 = vmatpush1.msra.mxu0 0.0
        %946 = vmatprep.subr.mxu0 0.0
        %947 = vmatpush1.msra.mxu0 0.0
        %948 = vmatprep.subr.mxu0 0.0
        %949 = vmatpush1.msra.mxu0 0.0
        %950 = vmatprep.subr.mxu0 0.0
        %951 = vmatpush1.msra.mxu0 0.0
        %952 = vmatprep.subr.mxu0 0.0
        %953 = vmatpush1.msra.mxu0 0.0
        %954 = vmatprep.subr.mxu0 0.0
        %955 = vmatpush1.msra.mxu0 0.0
        %956 = vmatprep.subr.mxu0 0.0
        %957 = vmatpush1.msra.mxu0 0.0
        %958 = vmatprep.subr.mxu0 0.0
        %959 = vmatpush1.msra.mxu0 0.0
        %960 = vmatprep.subr.mxu0 0.0
        %961 = vmatpush1.msra.mxu0 0.0
        %962 = vmatprep.subr.mxu0 0.0
        %963 = vmatpush1.msra.mxu0 0.0
        %964 = vmatprep.subr.mxu0 0.0
        %965 = vmatpush1.msra.mxu0 0.0
        %966 = vmatprep.subr.mxu0 0.0
        %967 = vmatpush1.msra.mxu0 0.0
        %968 = vmatprep.subr.mxu0 0.0
        %969 = vmatpush1.msra.mxu0 0.0
        %970 = vmatprep.mubr.f32.mxu0 0.0
        %971 = vmatmul.mubr.f32.gmra.mrb[0].mxu0 %v395
        %v972 = vpop.f32.mrb[0].mxu0
        %v973 = vadd.f32 0.0, %v972
        %v974 = vpop.f32.mrb[0].mxu0
        %975 = vmatprep.mubr.f32.mxu0 0.0
        %976 = vmatmul.mubr.f32.gmra.mrb[0].mxu0 %v400
        %v977 = vpop.f32.mrb[0].mxu0
        %v978 = vadd.f32 0.0, %v977
        %v979 = vpop.f32.mrb[0].mxu0
        %980 = vdwg.mxu0
        %981 = vmatprep.subr.mxu0 0.0
        %982 = vmatpush1.msra.mxu0 %v799
        %983 = vmatprep.subr.mxu0 0.0
        %984 = vmatpush1.msra.mxu0 %v800
        %985 = vmatprep.subr.mxu0 0.0
        %986 = vmatpush1.msra.mxu0 %v801
        %987 = vmatprep.subr.mxu0 0.0
        %988 = vmatpush1.msra.mxu0 %v802
        %989 = vmatprep.subr.mxu0 0.0
        %990 = vmatpush1.msra.mxu0 %v803
        %991 = vmatprep.subr.mxu0 0.0
        %992 = vmatpush1.msra.mxu0 %v804
        %993 = vmatprep.subr.mxu0 0.0
        %994 = vmatpush1.msra.mxu0 %v805
        %995 = vmatprep.subr.mxu0 0.0
        %996 = vmatpush1.msra.mxu0 %v806
        %997 = vmatprep.subr.mxu0 0.0
        %998 = vmatpush1.msra.mxu0 %v807
        %999 = vmatprep.subr.mxu0 0.0
        %1000 = vmatpush1.msra.mxu0 %v808
        %1001 = vmatprep.subr.mxu0 0.0
        %1002 = vmatpush1.msra.mxu0 %v809
        %1003 = vmatprep.subr.mxu0 0.0
        %1004 = vmatpush1.msra.mxu0 %v810
        %1005 = vmatprep.subr.mxu0 0.0
        %1006 = vmatpush1.msra.mxu0 %v811
        %1007 = vmatprep.subr.mxu0 0.0
        %1008 = vmatpush1.msra.mxu0 %v812
        %1009 = vmatprep.subr.mxu0 0.0
        %1010 = vmatpush1.msra.mxu0 %v813
        %1011 = vmatprep.subr.mxu0 0.0
        %1012 = vmatpush1.msra.mxu0 %v814
        %1013 = vmatprep.subr.mxu0 0.0
        %1014 = vmatpush1.msra.mxu0 0.0
        %1015 = vmatprep.subr.mxu0 0.0
        %1016 = vmatpush1.msra.mxu0 0.0
        %1017 = vmatprep.subr.mxu0 0.0
        %1018 = vmatpush1.msra.mxu0 0.0
        %1019 = vmatprep.subr.mxu0 0.0
        %1020 = vmatpush1.msra.mxu0 0.0
        %1021 = vmatprep.subr.mxu0 0.0
        %1022 = vmatpush1.msra.mxu0 0.0
        %1023 = vmatprep.subr.mxu0 0.0
        %1024 = vmatpush1.msra.mxu0 0.0
        %1025 = vmatprep.subr.mxu0 0.0
        %1026 = vmatpush1.msra.mxu0 0.0
        %1027 = vmatprep.subr.mxu0 0.0
        %1028 = vmatpush1.msra.mxu0 0.0
        %1029 = vmatprep.subr.mxu0 0.0
        %1030 = vmatpush1.msra.mxu0 0.0
        %1031 = vmatprep.subr.mxu0 0.0
        %1032 = vmatpush1.msra.mxu0 0.0
        %1033 = vmatprep.subr.mxu0 0.0
        %1034 = vmatpush1.msra.mxu0 0.0
        %1035 = vmatprep.subr.mxu0 0.0
        %1036 = vmatpush1.msra.mxu0 0.0
        %1037 = vmatprep.subr.mxu0 0.0
        %1038 = vmatpush1.msra.mxu0 0.0
        %1039 = vmatprep.subr.mxu0 0.0
        %1040 = vmatpush1.msra.mxu0 0.0
        %1041 = vmatprep.subr.mxu0 0.0
        %1042 = vmatpush1.msra.mxu0 0.0
        %1043 = vmatprep.subr.mxu0 0.0
        %1044 = vmatpush1.msra.mxu0 0.0
        %1045 = vmatprep.mubr.f32.mxu0 0.0
        %1046 = vmatmul.mubr.f32.gmra.mrb[0].mxu0 %v395
        %v1047 = vpop.f32.mrb[0].mxu0
        %v1048 = vadd.f32 0.0, %v1047
        %v1049 = vpop.f32.mrb[0].mxu0
        %1050 = vmatprep.mubr.f32.mxu0 0.0
        %1051 = vmatmul.mubr.f32.gmra.mrb[0].mxu0 %v400
        %v1052 = vpop.f32.mrb[0].mxu0
        %v1053 = vadd.f32 0.0, %v1052
        %v1054 = vpop.f32.mrb[0].mxu0
        %1055 = vdwg.mxu0
        %1056 = vmatprep.subr.mxu0 0.0
        %1057 = vmatpush1.msra.mxu0 %v815
        %1058 = vmatprep.subr.mxu0 0.0
        %1059 = vmatpush1.msra.mxu0 %v816
        %1060 = vmatprep.subr.mxu0 0.0
        %1061 = vmatpush1.msra.mxu0 %v817
        %1062 = vmatprep.subr.mxu0 0.0
        %1063 = vmatpush1.msra.mxu0 %v818
        %1064 = vmatprep.subr.mxu0 0.0
        %1065 = vmatpush1.msra.mxu0 %v819
        %1066 = vmatprep.subr.mxu0 0.0
        %1067 = vmatpush1.msra.mxu0 %v820
        %1068 = vmatprep.subr.mxu0 0.0
        %1069 = vmatpush1.msra.mxu0 %v821
        %1070 = vmatprep.subr.mxu0 0.0
        %1071 = vmatpush1.msra.mxu0 %v822
        %1072 = vmatprep.subr.mxu0 0.0
        %1073 = vmatpush1.msra.mxu0 %v823
        %1074 = vmatprep.subr.mxu0 0.0
        %1075 = vmatpush1.msra.mxu0 %v824
        %1076 = vmatprep.subr.mxu0 0.0
        %1077 = vmatpush1.msra.mxu0 %v825
        %1078 = vmatprep.subr.mxu0 0.0
        %1079 = vmatpush1.msra.mxu0 %v826
        %1080 = vmatprep.subr.mxu0 0.0
        %1081 = vmatpush1.msra.mxu0 %v827
        %1082 = vmatprep.subr.mxu0 0.0
        %1083 = vmatpush1.msra.mxu0 %v828
        %1084 = vmatprep.subr.mxu0 0.0
        %1085 = vmatpush1.msra.mxu0 %v829
        %1086 = vmatprep.subr.mxu0 0.0
        %1087 = vmatpush1.msra.mxu0 %v830
        %1088 = vmatprep.subr.mxu0 0.0
        %1089 = vmatpush1.msra.mxu0 0.0
        %1090 = vmatprep.subr.mxu0 0.0
        %1091 = vmatpush1.msra.mxu0 0.0
        %1092 = vmatprep.subr.mxu0 0.0
        %1093 = vmatpush1.msra.mxu0 0.0
        %1094 = vmatprep.subr.mxu0 0.0
        %1095 = vmatpush1.msra.mxu0 0.0
        %1096 = vmatprep.subr.mxu0 0.0
        %1097 = vmatpush1.msra.mxu0 0.0
        %1098 = vmatprep.subr.mxu0 0.0
        %1099 = vmatpush1.msra.mxu0 0.0
        %1100 = vmatprep.subr.mxu0 0.0
        %1101 = vmatpush1.msra.mxu0 0.0
        %1102 = vmatprep.subr.mxu0 0.0
        %1103 = vmatpush1.msra.mxu0 0.0
        %1104 = vmatprep.subr.mxu0 0.0
        %1105 = vmatpush1.msra.mxu0 0.0
        %1106 = vmatprep.subr.mxu0 0.0
        %1107 = vmatpush1.msra.mxu0 0.0
        %1108 = vmatprep.subr.mxu0 0.0
        %1109 = vmatpush1.msra.mxu0 0.0
        %1110 = vmatprep.subr.mxu0 0.0
        %1111 = vmatpush1.msra.mxu0 0.0
        %1112 = vmatprep.subr.mxu0 0.0
        %1113 = vmatpush1.msra.mxu0 0.0
        %1114 = vmatprep.subr.mxu0 0.0
        %1115 = vmatpush1.msra.mxu0 0.0
        %1116 = vmatprep.subr.mxu0 0.0
        %1117 = vmatpush1.msra.mxu0 0.0
        %1118 = vmatprep.subr.mxu0 0.0
        %1119 = vmatpush1.msra.mxu0 0.0
        %1120 = vmatprep.mubr.f32.mxu0 0.0
        %1121 = vmatmul.mubr.f32.gmra.mrb[0].mxu0 %v395
        %v1122 = vpop.f32.mrb[0].mxu0
        %v1123 = vadd.f32 0.0, %v1122
        %v1124 = vpop.f32.mrb[0].mxu0
        %1125 = vmatprep.mubr.f32.mxu0 0.0
        %1126 = vmatmul.mubr.f32.gmra.mrb[0].mxu0 %v400
        %v1127 = vpop.f32.mrb[0].mxu0
        %v1128 = vadd.f32 0.0, %v1127
        %v1129 = vpop.f32.mrb[0].mxu0
        %1130 = vdwg.mxu0
        %v1131 = vld [vmem:[%s5] sm:$0xff]
        %v1132 = vld [vmem:[%s5 + $0x8] sm:$0xff]
        %v1133 = vld [vmem:[%s5 + $0x10] sm:$0xff]
        %v1134 = vld [vmem:[%s5 + $0x18] sm:$0xff]
        %v1135 = vld [vmem:[%s5 + $0x20] sm:$0xff]
        %v1136 = vld [vmem:[%s5 + $0x28] sm:$0xff]
        %v1137 = vld [vmem:[%s5 + $0x30] sm:$0xff]
        %v1138 = vld [vmem:[%s5 + $0x38] sm:$0xff]
        %v1139 = vld [vmem:[%s5 + $0x40] sm:$0xff]
        %v1140 = vld [vmem:[%s5 + $0x48] sm:$0xff]
        %v1141 = vld [vmem:[%s5 + $0x50] sm:$0xff]
        %v1142 = vld [vmem:[%s5 + $0x58] sm:$0xff]
        %v1143 = vld [vmem:[%s5 + $0x60] sm:$0xff]
        %v1144 = vld [vmem:[%s5 + $0x68] sm:$0xff]
        %v1145 = vld [vmem:[%s5 + $0x70] sm:$0xff]
        %v1146 = vld [vmem:[%s5 + $0x78] sm:$0xff]
        %v1147 = vld [vmem:[%s5 + $0x80] sm:$0xff]
        %v1148 = vld [vmem:[%s5 + $0x88] sm:$0xff]
        %v1149 = vld [vmem:[%s5 + $0x90] sm:$0xff]
        %v1150 = vld [vmem:[%s5 + $0x98] sm:$0xff]
        %v1151 = vld [vmem:[%s5 + $0xa0] sm:$0xff]
        %v1152 = vld [vmem:[%s5 + $0xa8] sm:$0xff]
        %v1153 = vld [vmem:[%s5 + $0xb0] sm:$0xff]
        %v1154 = vld [vmem:[%s5 + $0xb8] sm:$0xff]
        %v1155 = vld [vmem:[%s5 + $0xc0] sm:$0xff]
        %v1156 = vld [vmem:[%s5 + $0xc8] sm:$0xff]
        %v1157 = vld [vmem:[%s5 + $0xd0] sm:$0xff]
        %v1158 = vld [vmem:[%s5 + $0xd8] sm:$0xff]
        %v1159 = vld [vmem:[%s5 + $0xe0] sm:$0xff]
        %v1160 = vld [vmem:[%s5 + $0xe8] sm:$0xff]
        %v1161 = vld [vmem:[%s5 + $0xf0] sm:$0xff]
        %v1162 = vld [vmem:[%s5 + $0xf8] sm:$0xff]
        %v1163 = vld [vmem:[%s5 + $0x100] sm:$0xff]
        %v1164 = vld [vmem:[%s5 + $0x108] sm:$0xff]
        %v1165 = vld [vmem:[%s5 + $0x110] sm:$0xff]
        %v1166 = vld [vmem:[%s5 + $0x118] sm:$0xff]
        %v1167 = vld [vmem:[%s5 + $0x120] sm:$0xff]
        %v1168 = vld [vmem:[%s5 + $0x128] sm:$0xff]
        %v1169 = vld [vmem:[%s5 + $0x130] sm:$0xff]
        %v1170 = vld [vmem:[%s5 + $0x138] sm:$0xff]
        %v1171 = vld [vmem:[%s5 + $0x140] sm:$0xff]
        %v1172 = vld [vmem:[%s5 + $0x148] sm:$0xff]
        %v1173 = vld [vmem:[%s5 + $0x150] sm:$0xff]
        %v1174 = vld [vmem:[%s5 + $0x158] sm:$0xff]
        %v1175 = vld [vmem:[%s5 + $0x160] sm:$0xff]
        %v1176 = vld [vmem:[%s5 + $0x168] sm:$0xff]
        %v1177 = vld [vmem:[%s5 + $0x170] sm:$0xff]
        %v1178 = vld [vmem:[%s5 + $0x178] sm:$0xff]
        %v1179 = vld [vmem:[%s5 + $0x180] sm:$0xff]
        %v1180 = vld [vmem:[%s5 + $0x188] sm:$0xff]
        %v1181 = vld [vmem:[%s5 + $0x190] sm:$0xff]
        %v1182 = vld [vmem:[%s5 + $0x198] sm:$0xff]
        %v1183 = vld [vmem:[%s5 + $0x1a0] sm:$0xff]
        %v1184 = vld [vmem:[%s5 + $0x1a8] sm:$0xff]
        %v1185 = vld [vmem:[%s5 + $0x1b0] sm:$0xff]
        %v1186 = vld [vmem:[%s5 + $0x1b8] sm:$0xff]
        %v1187 = vld [vmem:[%s5 + $0x1c0] sm:$0xff]
        %v1188 = vld [vmem:[%s5 + $0x1c8] sm:$0xff]
        %v1189 = vld [vmem:[%s5 + $0x1d0] sm:$0xff]
        %v1190 = vld [vmem:[%s5 + $0x1d8] sm:$0xff]
        %v1191 = vld [vmem:[%s5 + $0x1e0] sm:$0xff]
        %v1192 = vld [vmem:[%s5 + $0x1e8] sm:$0xff]
        %v1193 = vld [vmem:[%s5 + $0x1f0] sm:$0xff]
        %v1194 = vld [vmem:[%s5 + $0x1f8] sm:$0xff]
        %1195 = vmatprep.subr.mxu0 0.0
        %1196 = vmatpush1.msra.mxu0 %v1131
        %1197 = vmatprep.subr.mxu0 0.0
        %1198 = vmatpush1.msra.mxu0 %v1132
        %1199 = vmatprep.subr.mxu0 0.0
        %1200 = vmatpush1.msra.mxu0 %v1133
        %1201 = vmatprep.subr.mxu0 0.0
        %1202 = vmatpush1.msra.mxu0 %v1134
        %1203 = vmatprep.subr.mxu0 0.0
        %1204 = vmatpush1.msra.mxu0 %v1135
        %1205 = vmatprep.subr.mxu0 0.0
        %1206 = vmatpush1.msra.mxu0 %v1136
        %1207 = vmatprep.subr.mxu0 0.0
        %1208 = vmatpush1.msra.mxu0 %v1137
        %1209 = vmatprep.subr.mxu0 0.0
        %1210 = vmatpush1.msra.mxu0 %v1138
        %1211 = vmatprep.subr.mxu0 0.0
        %1212 = vmatpush1.msra.mxu0 %v1139
        %1213 = vmatprep.subr.mxu0 0.0
        %1214 = vmatpush1.msra.mxu0 %v1140
        %1215 = vmatprep.subr.mxu0 0.0
        %1216 = vmatpush1.msra.mxu0 %v1141
        %1217 = vmatprep.subr.mxu0 0.0
        %1218 = vmatpush1.msra.mxu0 %v1142
        %1219 = vmatprep.subr.mxu0 0.0
        %1220 = vmatpush1.msra.mxu0 %v1143
        %1221 = vmatprep.subr.mxu0 0.0
        %1222 = vmatpush1.msra.mxu0 %v1144
        %1223 = vmatprep.subr.mxu0 0.0
        %1224 = vmatpush1.msra.mxu0 %v1145
        %1225 = vmatprep.subr.mxu0 0.0
        %1226 = vmatpush1.msra.mxu0 %v1146
        %1227 = vmatprep.subr.mxu0 0.0
        %1228 = vmatpush1.msra.mxu0 0.0
        %1229 = vmatprep.subr.mxu0 0.0
        %1230 = vmatpush1.msra.mxu0 0.0
        %1231 = vmatprep.subr.mxu0 0.0
        %1232 = vmatpush1.msra.mxu0 0.0
        %1233 = vmatprep.subr.mxu0 0.0
        %1234 = vmatpush1.msra.mxu0 0.0
        %1235 = vmatprep.subr.mxu0 0.0
        %1236 = vmatpush1.msra.mxu0 0.0
        %1237 = vmatprep.subr.mxu0 0.0
        %1238 = vmatpush1.msra.mxu0 0.0
        %1239 = vmatprep.subr.mxu0 0.0
        %1240 = vmatpush1.msra.mxu0 0.0
        %1241 = vmatprep.subr.mxu0 0.0
        %1242 = vmatpush1.msra.mxu0 0.0
        %1243 = vmatprep.subr.mxu0 0.0
        %1244 = vmatpush1.msra.mxu0 0.0
        %1245 = vmatprep.subr.mxu0 0.0
        %1246 = vmatpush1.msra.mxu0 0.0
        %1247 = vmatprep.subr.mxu0 0.0
        %1248 = vmatpush1.msra.mxu0 0.0
        %1249 = vmatprep.subr.mxu0 0.0
        %1250 = vmatpush1.msra.mxu0 0.0
        %1251 = vmatprep.subr.mxu0 0.0
        %1252 = vmatpush1.msra.mxu0 0.0
        %1253 = vmatprep.subr.mxu0 0.0
        %1254 = vmatpush1.msra.mxu0 0.0
        %1255 = vmatprep.subr.mxu0 0.0
        %1256 = vmatpush1.msra.mxu0 0.0
        %1257 = vmatprep.subr.mxu0 0.0
        %1258 = vmatpush1.msra.mxu0 0.0
        %1259 = vmatprep.mubr.f32.mxu0 0.0
        %1260 = vmatmul.mubr.f32.gmra.mrb[0].mxu0 %v395
        %v1261 = vpop.f32.mrb[0].mxu0
        %v1262 = vadd.f32 0.0, %v1261
        %v1263 = vpop.f32.mrb[0].mxu0
        %1264 = vmatprep.mubr.f32.mxu0 0.0
        %1265 = vmatmul.mubr.f32.gmra.mrb[0].mxu0 %v400
        %v1266 = vpop.f32.mrb[0].mxu0
        %v1267 = vadd.f32 0.0, %v1266
        %v1268 = vpop.f32.mrb[0].mxu0
        %1269 = vdwg.mxu0
        %1270 = vmatprep.subr.mxu0 0.0
        %1271 = vmatpush1.msra.mxu0 %v1147
        %1272 = vmatprep.subr.mxu0 0.0
        %1273 = vmatpush1.msra.mxu0 %v1148
        %1274 = vmatprep.subr.mxu0 0.0
        %1275 = vmatpush1.msra.mxu0 %v1149
        %1276 = vmatprep.subr.mxu0 0.0
        %1277 = vmatpush1.msra.mxu0 %v1150
        %1278 = vmatprep.subr.mxu0 0.0
        %1279 = vmatpush1.msra.mxu0 %v1151
        %1280 = vmatprep.subr.mxu0 0.0
        %1281 = vmatpush1.msra.mxu0 %v1152
        %1282 = vmatprep.subr.mxu0 0.0
        %1283 = vmatpush1.msra.mxu0 %v1153
        %1284 = vmatprep.subr.mxu0 0.0
        %1285 = vmatpush1.msra.mxu0 %v1154
        %1286 = vmatprep.subr.mxu0 0.0
        %1287 = vmatpush1.msra.mxu0 %v1155
        %1288 = vmatprep.subr.mxu0 0.0
        %1289 = vmatpush1.msra.mxu0 %v1156
        %1290 = vmatprep.subr.mxu0 0.0
        %1291 = vmatpush1.msra.mxu0 %v1157
        %1292 = vmatprep.subr.mxu0 0.0
        %1293 = vmatpush1.msra.mxu0 %v1158
        %1294 = vmatprep.subr.mxu0 0.0
        %1295 = vmatpush1.msra.mxu0 %v1159
        %1296 = vmatprep.subr.mxu0 0.0
        %1297 = vmatpush1.msra.mxu0 %v1160
        %1298 = vmatprep.subr.mxu0 0.0
        %1299 = vmatpush1.msra.mxu0 %v1161
        %1300 = vmatprep.subr.mxu0 0.0
        %1301 = vmatpush1.msra.mxu0 %v1162
        %1302 = vmatprep.subr.mxu0 0.0
        %1303 = vmatpush1.msra.mxu0 0.0
        %1304 = vmatprep.subr.mxu0 0.0
        %1305 = vmatpush1.msra.mxu0 0.0
        %1306 = vmatprep.subr.mxu0 0.0
        %1307 = vmatpush1.msra.mxu0 0.0
        %1308 = vmatprep.subr.mxu0 0.0
        %1309 = vmatpush1.msra.mxu0 0.0
        %1310 = vmatprep.subr.mxu0 0.0
        %1311 = vmatpush1.msra.mxu0 0.0
        %1312 = vmatprep.subr.mxu0 0.0
        %1313 = vmatpush1.msra.mxu0 0.0
        %1314 = vmatprep.subr.mxu0 0.0
        %1315 = vmatpush1.msra.mxu0 0.0
        %1316 = vmatprep.subr.mxu0 0.0
        %1317 = vmatpush1.msra.mxu0 0.0
        %1318 = vmatprep.subr.mxu0 0.0
        %1319 = vmatpush1.msra.mxu0 0.0
        %1320 = vmatprep.subr.mxu0 0.0
        %1321 = vmatpush1.msra.mxu0 0.0
        %1322 = vmatprep.subr.mxu0 0.0
        %1323 = vmatpush1.msra.mxu0 0.0
        %1324 = vmatprep.subr.mxu0 0.0
        %1325 = vmatpush1.msra.mxu0 0.0
        %1326 = vmatprep.subr.mxu0 0.0
        %1327 = vmatpush1.msra.mxu0 0.0
        %1328 = vmatprep.subr.mxu0 0.0
        %1329 = vmatpush1.msra.mxu0 0.0
        %1330 = vmatprep.subr.mxu0 0.0
        %1331 = vmatpush1.msra.mxu0 0.0
        %1332 = vmatprep.subr.mxu0 0.0
        %1333 = vmatpush1.msra.mxu0 0.0
        %1334 = vmatprep.mubr.f32.mxu0 0.0
        %1335 = vmatmul.mubr.f32.gmra.mrb[0].mxu0 %v395
        %v1336 = vpop.f32.mrb[0].mxu0
        %v1337 = vadd.f32 0.0, %v1336
        %v1338 = vpop.f32.mrb[0].mxu0
        %1339 = vmatprep.mubr.f32.mxu0 0.0
        %1340 = vmatmul.mubr.f32.gmra.mrb[0].mxu0 %v400
        %v1341 = vpop.f32.mrb[0].mxu0
        %v1342 = vadd.f32 0.0, %v1341
        %v1343 = vpop.f32.mrb[0].mxu0
        %1344 = vdwg.mxu0
        %1345 = vmatprep.subr.mxu0 0.0
        %1346 = vmatpush1.msra.mxu0 %v1163
        %1347 = vmatprep.subr.mxu0 0.0
        %1348 = vmatpush1.msra.mxu0 %v1164
        %1349 = vmatprep.subr.mxu0 0.0
        %1350 = vmatpush1.msra.mxu0 %v1165
        %1351 = vmatprep.subr.mxu0 0.0
        %1352 = vmatpush1.msra.mxu0 %v1166
        %1353 = vmatprep.subr.mxu0 0.0
        %1354 = vmatpush1.msra.mxu0 %v1167
        %1355 = vmatprep.subr.mxu0 0.0
        %1356 = vmatpush1.msra.mxu0 %v1168
        %1357 = vmatprep.subr.mxu0 0.0
        %1358 = vmatpush1.msra.mxu0 %v1169
        %1359 = vmatprep.subr.mxu0 0.0
        %1360 = vmatpush1.msra.mxu0 %v1170
        %1361 = vmatprep.subr.mxu0 0.0
        %1362 = vmatpush1.msra.mxu0 %v1171
        %1363 = vmatprep.subr.mxu0 0.0
        %1364 = vmatpush1.msra.mxu0 %v1172
        %1365 = vmatprep.subr.mxu0 0.0
        %1366 = vmatpush1.msra.mxu0 %v1173
        %1367 = vmatprep.subr.mxu0 0.0
        %1368 = vmatpush1.msra.mxu0 %v1174
        %1369 = vmatprep.subr.mxu0 0.0
        %1370 = vmatpush1.msra.mxu0 %v1175
        %1371 = vmatprep.subr.mxu0 0.0
        %1372 = vmatpush1.msra.mxu0 %v1176
        %1373 = vmatprep.subr.mxu0 0.0
        %1374 = vmatpush1.msra.mxu0 %v1177
        %1375 = vmatprep.subr.mxu0 0.0
        %1376 = vmatpush1.msra.mxu0 %v1178
        %1377 = vmatprep.subr.mxu0 0.0
        %1378 = vmatpush1.msra.mxu0 0.0
        %1379 = vmatprep.subr.mxu0 0.0
        %1380 = vmatpush1.msra.mxu0 0.0
        %1381 = vmatprep.subr.mxu0 0.0
        %1382 = vmatpush1.msra.mxu0 0.0
        %1383 = vmatprep.subr.mxu0 0.0
        %1384 = vmatpush1.msra.mxu0 0.0
        %1385 = vmatprep.subr.mxu0 0.0
        %1386 = vmatpush1.msra.mxu0 0.0
        %1387 = vmatprep.subr.mxu0 0.0
        %1388 = vmatpush1.msra.mxu0 0.0
        %1389 = vmatprep.subr.mxu0 0.0
        %1390 = vmatpush1.msra.mxu0 0.0
        %1391 = vmatprep.subr.mxu0 0.0
        %1392 = vmatpush1.msra.mxu0 0.0
        %1393 = vmatprep.subr.mxu0 0.0
        %1394 = vmatpush1.msra.mxu0 0.0
        %1395 = vmatprep.subr.mxu0 0.0
        %1396 = vmatpush1.msra.mxu0 0.0
        %1397 = vmatprep.subr.mxu0 0.0
        %1398 = vmatpush1.msra.mxu0 0.0
        %1399 = vmatprep.subr.mxu0 0.0
        %1400 = vmatpush1.msra.mxu0 0.0
        %1401 = vmatprep.subr.mxu0 0.0
        %1402 = vmatpush1.msra.mxu0 0.0
        %1403 = vmatprep.subr.mxu0 0.0
        %1404 = vmatpush1.msra.mxu0 0.0
        %1405 = vmatprep.subr.mxu0 0.0
        %1406 = vmatpush1.msra.mxu0 0.0
        %1407 = vmatprep.subr.mxu0 0.0
        %1408 = vmatpush1.msra.mxu0 0.0
        %1409 = vmatprep.mubr.f32.mxu0 0.0
        %1410 = vmatmul.mubr.f32.gmra.mrb[0].mxu0 %v395
        %v1411 = vpop.f32.mrb[0].mxu0
        %v1412 = vadd.f32 0.0, %v1411
        %v1413 = vpop.f32.mrb[0].mxu0
        %1414 = vmatprep.mubr.f32.mxu0 0.0
        %1415 = vmatmul.mubr.f32.gmra.mrb[0].mxu0 %v400
        %v1416 = vpop.f32.mrb[0].mxu0
        %v1417 = vadd.f32 0.0, %v1416
        %v1418 = vpop.f32.mrb[0].mxu0
        %1419 = vdwg.mxu0
        %1420 = vmatprep.subr.mxu0 0.0
        %1421 = vmatpush1.msra.mxu0 %v1179
        %1422 = vmatprep.subr.mxu0 0.0
        %1423 = vmatpush1.msra.mxu0 %v1180
        %1424 = vmatprep.subr.mxu0 0.0
        %1425 = vmatpush1.msra.mxu0 %v1181
        %1426 = vmatprep.subr.mxu0 0.0
        %1427 = vmatpush1.msra.mxu0 %v1182
        %1428 = vmatprep.subr.mxu0 0.0
        %1429 = vmatpush1.msra.mxu0 %v1183
        %1430 = vmatprep.subr.mxu0 0.0
        %1431 = vmatpush1.msra.mxu0 %v1184
        %1432 = vmatprep.subr.mxu0 0.0
        %1433 = vmatpush1.msra.mxu0 %v1185
        %1434 = vmatprep.subr.mxu0 0.0
        %1435 = vmatpush1.msra.mxu0 %v1186
        %1436 = vmatprep.subr.mxu0 0.0
        %1437 = vmatpush1.msra.mxu0 %v1187
        %1438 = vmatprep.subr.mxu0 0.0
        %1439 = vmatpush1.msra.mxu0 %v1188
        %1440 = vmatprep.subr.mxu0 0.0
        %1441 = vmatpush1.msra.mxu0 %v1189
        %1442 = vmatprep.subr.mxu0 0.0
        %1443 = vmatpush1.msra.mxu0 %v1190
        %1444 = vmatprep.subr.mxu0 0.0
        %1445 = vmatpush1.msra.mxu0 %v1191
        %1446 = vmatprep.subr.mxu0 0.0
        %1447 = vmatpush1.msra.mxu0 %v1192
        %1448 = vmatprep.subr.mxu0 0.0
        %1449 = vmatpush1.msra.mxu0 %v1193
        %1450 = vmatprep.subr.mxu0 0.0
        %1451 = vmatpush1.msra.mxu0 %v1194
        %1452 = vmatprep.subr.mxu0 0.0
        %1453 = vmatpush1.msra.mxu0 0.0
        %1454 = vmatprep.subr.mxu0 0.0
        %1455 = vmatpush1.msra.mxu0 0.0
        %1456 = vmatprep.subr.mxu0 0.0
        %1457 = vmatpush1.msra.mxu0 0.0
        %1458 = vmatprep.subr.mxu0 0.0
        %1459 = vmatpush1.msra.mxu0 0.0
        %1460 = vmatprep.subr.mxu0 0.0
        %1461 = vmatpush1.msra.mxu0 0.0
        %1462 = vmatprep.subr.mxu0 0.0
        %1463 = vmatpush1.msra.mxu0 0.0
        %1464 = vmatprep.subr.mxu0 0.0
        %1465 = vmatpush1.msra.mxu0 0.0
        %1466 = vmatprep.subr.mxu0 0.0
        %1467 = vmatpush1.msra.mxu0 0.0
        %1468 = vmatprep.subr.mxu0 0.0
        %1469 = vmatpush1.msra.mxu0 0.0
        %1470 = vmatprep.subr.mxu0 0.0
        %1471 = vmatpush1.msra.mxu0 0.0
        %1472 = vmatprep.subr.mxu0 0.0
        %1473 = vmatpush1.msra.mxu0 0.0
        %1474 = vmatprep.subr.mxu0 0.0
        %1475 = vmatpush1.msra.mxu0 0.0
        %1476 = vmatprep.subr.mxu0 0.0
        %1477 = vmatpush1.msra.mxu0 0.0
        %1478 = vmatprep.subr.mxu0 0.0
        %1479 = vmatpush1.msra.mxu0 0.0
        %1480 = vmatprep.subr.mxu0 0.0
        %1481 = vmatpush1.msra.mxu0 0.0
        %1482 = vmatprep.subr.mxu0 0.0
        %1483 = vmatpush1.msra.mxu0 0.0
        %1484 = vmatprep.mubr.f32.mxu0 0.0
        %1485 = vmatmul.mubr.f32.gmra.mrb[0].mxu0 %v395
        %v1486 = vpop.f32.mrb[0].mxu0
        %v1487 = vadd.f32 0.0, %v1486
        %v1488 = vpop.f32.mrb[0].mxu0
        %1489 = vmatprep.mubr.f32.mxu0 0.0
        %1490 = vmatmul.mubr.f32.gmra.mrb[0].mxu0 %v400
        %v1491 = vpop.f32.mrb[0].mxu0
        %v1492 = vadd.f32 0.0, %v1491
        %v1493 = vpop.f32.mrb[0].mxu0
        %1494 = vdwg.mxu0
        %vm1495 = vcmask 261120
        %v1497 = vsel %vm1495, %v534, 0
        %v1500 = vsel %vm1495, %v539, 0
        %v1503 = vsel %vm1495, %v898, 0
        %v1506 = vsel %vm1495, %v903, 0
        %1508 = vmatprep.subr.mxu0 0.0
        %1509 = vmatpush1.xpose.msra.mxu0 %v1503
        %1510 = vmatprep.subr.mxu0 0.0
        %1511 = vmatpush1.xpose.msra.mxu0 %v1506
        %1512 = vmatprep.subr.mxu0 0.0
        %1513 = vmatpush1.xpose.msra.mxu0 0.0
        %1514 = vmatprep.subr.mxu0 0.0
        %1515 = vmatpush1.xpose.msra.mxu0 0.0
        %1516 = vmatprep.subr.mxu0 0.0
        %1517 = vmatpush1.xpose.msra.mxu0 0.0
        %1518 = vmatprep.subr.mxu0 0.0
        %1519 = vmatpush1.xpose.msra.mxu0 0.0
        %1520 = vmatprep.subr.mxu0 0.0
        %1521 = vmatpush1.xpose.msra.mxu0 0.0
        %1522 = vmatprep.subr.mxu0 0.0
        %1523 = vmatpush1.xpose.msra.mxu0 0.0
        %1524 = vmatprep.subr.mxu0 0.0
        %1525 = vmatpush1.xpose.msra.mxu0 0.0
        %1526 = vmatprep.subr.mxu0 0.0
        %1527 = vmatpush1.xpose.msra.mxu0 0.0
        %1528 = vmatprep.subr.mxu0 0.0
        %1529 = vmatpush1.xpose.msra.mxu0 0.0
        %1530 = vmatprep.subr.mxu0 0.0
        %1531 = vmatpush1.xpose.msra.mxu0 0.0
        %1532 = vmatprep.subr.mxu0 0.0
        %1533 = vmatpush1.xpose.msra.mxu0 0.0
        %1534 = vmatprep.subr.mxu0 0.0
        %1535 = vmatpush1.xpose.msra.mxu0 0.0
        %1536 = vmatprep.subr.mxu0 0.0
        %1537 = vmatpush1.xpose.msra.mxu0 0.0
        %1538 = vmatprep.subr.mxu0 0.0
        %1539 = vmatpush1.xpose.msra.mxu0 0.0
        %1540 = vmatprep.subr.mxu0 0.0
        %1541 = vmatpush1.xpose.msra.mxu0 0.0
        %1542 = vmatprep.subr.mxu0 0.0
        %1543 = vmatpush1.xpose.msra.mxu0 0.0
        %1544 = vmatprep.subr.mxu0 0.0
        %1545 = vmatpush1.xpose.msra.mxu0 0.0
        %1546 = vmatprep.subr.mxu0 0.0
        %1547 = vmatpush1.xpose.msra.mxu0 0.0
        %1548 = vmatprep.subr.mxu0 0.0
        %1549 = vmatpush1.xpose.msra.mxu0 0.0
        %1550 = vmatprep.subr.mxu0 0.0
        %1551 = vmatpush1.xpose.msra.mxu0 0.0
        %1552 = vmatprep.subr.mxu0 0.0
        %1553 = vmatpush1.xpose.msra.mxu0 0.0
        %1554 = vmatprep.subr.mxu0 0.0
        %1555 = vmatpush1.xpose.msra.mxu0 0.0
        %1556 = vmatprep.subr.mxu0 0.0
        %1557 = vmatpush1.xpose.msra.mxu0 0.0
        %1558 = vmatprep.subr.mxu0 0.0
        %1559 = vmatpush1.xpose.msra.mxu0 0.0
        %1560 = vmatprep.subr.mxu0 0.0
        %1561 = vmatpush1.xpose.msra.mxu0 0.0
        %1562 = vmatprep.subr.mxu0 0.0
        %1563 = vmatpush1.xpose.msra.mxu0 0.0
        %1564 = vmatprep.subr.mxu0 0.0
        %1565 = vmatpush1.xpose.msra.mxu0 0.0
        %1566 = vmatprep.subr.mxu0 0.0
        %1567 = vmatpush1.xpose.msra.mxu0 0.0
        %1568 = vmatprep.subr.mxu0 0.0
        %1569 = vmatpush1.xpose.msra.mxu0 0.0
        %1570 = vmatprep.subr.mxu0 0.0
        %1571 = vmatpush1.xpose.msra.mxu0 0.0
        %1572 = vmatprep.mubr.f32.mxu0 0.0
        %1573 = vmatmul.mubr.f32.gmra.mrb[0].mxu0 %v1497
        %v1574 = vpop.f32.mrb[0].mxu0
        %v1575 = vadd.f32 0.0, %v1574
        %v1576 = vpop.f32.mrb[0].mxu0
        %1577 = vmatprep.mubr.f32.mxu0 0.0
        %1578 = vmatmul.mubr.f32.gmra.mrb[0].mxu0 %v1500
        %v1579 = vpop.f32.mrb[0].mxu0
        %v1580 = vadd.f32 0.0, %v1579
        %v1581 = vpop.f32.mrb[0].mxu0
        %1582 = vdwg.mxu0
        %v1584 = vsel %vm1495, %v609, 0
        %v1587 = vsel %vm1495, %v614, 0
        %v1590 = vsel %vm1495, %v973, 0
        %v1593 = vsel %vm1495, %v978, 0
        %1595 = vmatprep.subr.mxu0 0.0
        %1596 = vmatpush1.xpose.msra.mxu0 %v1590
        %1597 = vmatprep.subr.mxu0 0.0
        %1598 = vmatpush1.xpose.msra.mxu0 %v1593
        %1599 = vmatprep.subr.mxu0 0.0
        %1600 = vmatpush1.xpose.msra.mxu0 0.0
        %1601 = vmatprep.subr.mxu0 0.0
        %1602 = vmatpush1.xpose.msra.mxu0 0.0
        %1603 = vmatprep.subr.mxu0 0.0
        %1604 = vmatpush1.xpose.msra.mxu0 0.0
        %1605 = vmatprep.subr.mxu0 0.0
        %1606 = vmatpush1.xpose.msra.mxu0 0.0
        %1607 = vmatprep.subr.mxu0 0.0
        %1608 = vmatpush1.xpose.msra.mxu0 0.0
        %1609 = vmatprep.subr.mxu0 0.0
        %1610 = vmatpush1.xpose.msra.mxu0 0.0
        %1611 = vmatprep.subr.mxu0 0.0
        %1612 = vmatpush1.xpose.msra.mxu0 0.0
        %1613 = vmatprep.subr.mxu0 0.0
        %1614 = vmatpush1.xpose.msra.mxu0 0.0
        %1615 = vmatprep.subr.mxu0 0.0
        %1616 = vmatpush1.xpose.msra.mxu0 0.0
        %1617 = vmatprep.subr.mxu0 0.0
        %1618 = vmatpush1.xpose.msra.mxu0 0.0
        %1619 = vmatprep.subr.mxu0 0.0
        %1620 = vmatpush1.xpose.msra.mxu0 0.0
        %1621 = vmatprep.subr.mxu0 0.0
        %1622 = vmatpush1.xpose.msra.mxu0 0.0
        %1623 = vmatprep.subr.mxu0 0.0
        %1624 = vmatpush1.xpose.msra.mxu0 0.0
        %1625 = vmatprep.subr.mxu0 0.0
        %1626 = vmatpush1.xpose.msra.mxu0 0.0
        %1627 = vmatprep.subr.mxu0 0.0
        %1628 = vmatpush1.xpose.msra.mxu0 0.0
        %1629 = vmatprep.subr.mxu0 0.0
        %1630 = vmatpush1.xpose.msra.mxu0 0.0
        %1631 = vmatprep.subr.mxu0 0.0
        %1632 = vmatpush1.xpose.msra.mxu0 0.0
        %1633 = vmatprep.subr.mxu0 0.0
        %1634 = vmatpush1.xpose.msra.mxu0 0.0
        %1635 = vmatprep.subr.mxu0 0.0
        %1636 = vmatpush1.xpose.msra.mxu0 0.0
        %1637 = vmatprep.subr.mxu0 0.0
        %1638 = vmatpush1.xpose.msra.mxu0 0.0
        %1639 = vmatprep.subr.mxu0 0.0
        %1640 = vmatpush1.xpose.msra.mxu0 0.0
        %1641 = vmatprep.subr.mxu0 0.0
        %1642 = vmatpush1.xpose.msra.mxu0 0.0
        %1643 = vmatprep.subr.mxu0 0.0
        %1644 = vmatpush1.xpose.msra.mxu0 0.0
        %1645 = vmatprep.subr.mxu0 0.0
        %1646 = vmatpush1.xpose.msra.mxu0 0.0
        %1647 = vmatprep.subr.mxu0 0.0
        %1648 = vmatpush1.xpose.msra.mxu0 0.0
        %1649 = vmatprep.subr.mxu0 0.0
        %1650 = vmatpush1.xpose.msra.mxu0 0.0
        %1651 = vmatprep.subr.mxu0 0.0
        %1652 = vmatpush1.xpose.msra.mxu0 0.0
        %1653 = vmatprep.subr.mxu0 0.0
        %1654 = vmatpush1.xpose.msra.mxu0 0.0
        %1655 = vmatprep.subr.mxu0 0.0
        %1656 = vmatpush1.xpose.msra.mxu0 0.0
        %1657 = vmatprep.subr.mxu0 0.0
        %1658 = vmatpush1.xpose.msra.mxu0 0.0
        %1659 = vmatprep.mubr.f32.mxu0 0.0
        %1660 = vmatmul.mubr.f32.gmra.mrb[0].mxu0 %v1584
        %v1661 = vpop.f32.mrb[0].mxu0
        %v1662 = vadd.f32 0.0, %v1661
        %v1663 = vpop.f32.mrb[0].mxu0
        %1664 = vmatprep.mubr.f32.mxu0 0.0
        %1665 = vmatmul.mubr.f32.gmra.mrb[0].mxu0 %v1587
        %v1666 = vpop.f32.mrb[0].mxu0
        %v1667 = vadd.f32 0.0, %v1666
        %v1668 = vpop.f32.mrb[0].mxu0
        %1669 = vdwg.mxu0
        %v1671 = vsel %vm1495, %v684, 0
        %v1674 = vsel %vm1495, %v689, 0
        %v1677 = vsel %vm1495, %v1048, 0
        %v1680 = vsel %vm1495, %v1053, 0
        %1682 = vmatprep.subr.mxu0 0.0
        %1683 = vmatpush1.xpose.msra.mxu0 %v1677
        %1684 = vmatprep.subr.mxu0 0.0
        %1685 = vmatpush1.xpose.msra.mxu0 %v1680
        %1686 = vmatprep.subr.mxu0 0.0
        %1687 = vmatpush1.xpose.msra.mxu0 0.0
        %1688 = vmatprep.subr.mxu0 0.0
        %1689 = vmatpush1.xpose.msra.mxu0 0.0
        %1690 = vmatprep.subr.mxu0 0.0
        %1691 = vmatpush1.xpose.msra.mxu0 0.0
        %1692 = vmatprep.subr.mxu0 0.0
        %1693 = vmatpush1.xpose.msra.mxu0 0.0
        %1694 = vmatprep.subr.mxu0 0.0
        %1695 = vmatpush1.xpose.msra.mxu0 0.0
        %1696 = vmatprep.subr.mxu0 0.0
        %1697 = vmatpush1.xpose.msra.mxu0 0.0
        %1698 = vmatprep.subr.mxu0 0.0
        %1699 = vmatpush1.xpose.msra.mxu0 0.0
        %1700 = vmatprep.subr.mxu0 0.0
        %1701 = vmatpush1.xpose.msra.mxu0 0.0
        %1702 = vmatprep.subr.mxu0 0.0
        %1703 = vmatpush1.xpose.msra.mxu0 0.0
        %1704 = vmatprep.subr.mxu0 0.0
        %1705 = vmatpush1.xpose.msra.mxu0 0.0
        %1706 = vmatprep.subr.mxu0 0.0
        %1707 = vmatpush1.xpose.msra.mxu0 0.0
        %1708 = vmatprep.subr.mxu0 0.0
        %1709 = vmatpush1.xpose.msra.mxu0 0.0
        %1710 = vmatprep.subr.mxu0 0.0
        %1711 = vmatpush1.xpose.msra.mxu0 0.0
        %1712 = vmatprep.subr.mxu0 0.0
        %1713 = vmatpush1.xpose.msra.mxu0 0.0
        %1714 = vmatprep.subr.mxu0 0.0
        %1715 = vmatpush1.xpose.msra.mxu0 0.0
        %1716 = vmatprep.subr.mxu0 0.0
        %1717 = vmatpush1.xpose.msra.mxu0 0.0
        %1718 = vmatprep.subr.mxu0 0.0
        %1719 = vmatpush1.xpose.msra.mxu0 0.0
        %1720 = vmatprep.subr.mxu0 0.0
        %1721 = vmatpush1.xpose.msra.mxu0 0.0
        %1722 = vmatprep.subr.mxu0 0.0
        %1723 = vmatpush1.xpose.msra.mxu0 0.0
        %1724 = vmatprep.subr.mxu0 0.0
        %1725 = vmatpush1.xpose.msra.mxu0 0.0
        %1726 = vmatprep.subr.mxu0 0.0
        %1727 = vmatpush1.xpose.msra.mxu0 0.0
        %1728 = vmatprep.subr.mxu0 0.0
        %1729 = vmatpush1.xpose.msra.mxu0 0.0
        %1730 = vmatprep.subr.mxu0 0.0
        %1731 = vmatpush1.xpose.msra.mxu0 0.0
        %1732 = vmatprep.subr.mxu0 0.0
        %1733 = vmatpush1.xpose.msra.mxu0 0.0
        %1734 = vmatprep.subr.mxu0 0.0
        %1735 = vmatpush1.xpose.msra.mxu0 0.0
        %1736 = vmatprep.subr.mxu0 0.0
        %1737 = vmatpush1.xpose.msra.mxu0 0.0
        %1738 = vmatprep.subr.mxu0 0.0
        %1739 = vmatpush1.xpose.msra.mxu0 0.0
        %1740 = vmatprep.subr.mxu0 0.0
        %1741 = vmatpush1.xpose.msra.mxu0 0.0
        %1742 = vmatprep.subr.mxu0 0.0
        %1743 = vmatpush1.xpose.msra.mxu0 0.0
        %1744 = vmatprep.subr.mxu0 0.0
        %1745 = vmatpush1.xpose.msra.mxu0 0.0
        %1746 = vmatprep.mubr.f32.mxu0 0.0
        %1747 = vmatmul.mubr.f32.gmra.mrb[0].mxu0 %v1671
        %v1748 = vpop.f32.mrb[0].mxu0
        %v1749 = vadd.f32 0.0, %v1748
        %v1750 = vpop.f32.mrb[0].mxu0
        %1751 = vmatprep.mubr.f32.mxu0 0.0
        %1752 = vmatmul.mubr.f32.gmra.mrb[0].mxu0 %v1674
        %v1753 = vpop.f32.mrb[0].mxu0
        %v1754 = vadd.f32 0.0, %v1753
        %v1755 = vpop.f32.mrb[0].mxu0
        %1756 = vdwg.mxu0
        %v1758 = vsel %vm1495, %v759, 0
        %v1761 = vsel %vm1495, %v764, 0
        %v1764 = vsel %vm1495, %v1123, 0
        %v1767 = vsel %vm1495, %v1128, 0
        %1769 = vmatprep.subr.mxu0 0.0
        %1770 = vmatpush1.xpose.msra.mxu0 %v1764
        %1771 = vmatprep.subr.mxu0 0.0
        %1772 = vmatpush1.xpose.msra.mxu0 %v1767
        %1773 = vmatprep.subr.mxu0 0.0
        %1774 = vmatpush1.xpose.msra.mxu0 0.0
        %1775 = vmatprep.subr.mxu0 0.0
        %1776 = vmatpush1.xpose.msra.mxu0 0.0
        %1777 = vmatprep.subr.mxu0 0.0
        %1778 = vmatpush1.xpose.msra.mxu0 0.0
        %1779 = vmatprep.subr.mxu0 0.0
        %1780 = vmatpush1.xpose.msra.mxu0 0.0
        %1781 = vmatprep.subr.mxu0 0.0
        %1782 = vmatpush1.xpose.msra.mxu0 0.0
        %1783 = vmatprep.subr.mxu0 0.0
        %1784 = vmatpush1.xpose.msra.mxu0 0.0
        %1785 = vmatprep.subr.mxu0 0.0
        %1786 = vmatpush1.xpose.msra.mxu0 0.0
        %1787 = vmatprep.subr.mxu0 0.0
        %1788 = vmatpush1.xpose.msra.mxu0 0.0
        %1789 = vmatprep.subr.mxu0 0.0
        %1790 = vmatpush1.xpose.msra.mxu0 0.0
        %1791 = vmatprep.subr.mxu0 0.0
        %1792 = vmatpush1.xpose.msra.mxu0 0.0
        %1793 = vmatprep.subr.mxu0 0.0
        %1794 = vmatpush1.xpose.msra.mxu0 0.0
        %1795 = vmatprep.subr.mxu0 0.0
        %1796 = vmatpush1.xpose.msra.mxu0 0.0
        %1797 = vmatprep.subr.mxu0 0.0
        %1798 = vmatpush1.xpose.msra.mxu0 0.0
        %1799 = vmatprep.subr.mxu0 0.0
        %1800 = vmatpush1.xpose.msra.mxu0 0.0
        %1801 = vmatprep.subr.mxu0 0.0
        %1802 = vmatpush1.xpose.msra.mxu0 0.0
        %1803 = vmatprep.subr.mxu0 0.0
        %1804 = vmatpush1.xpose.msra.mxu0 0.0
        %1805 = vmatprep.subr.mxu0 0.0
        %1806 = vmatpush1.xpose.msra.mxu0 0.0
        %1807 = vmatprep.subr.mxu0 0.0
        %1808 = vmatpush1.xpose.msra.mxu0 0.0
        %1809 = vmatprep.subr.mxu0 0.0
        %1810 = vmatpush1.xpose.msra.mxu0 0.0
        %1811 = vmatprep.subr.mxu0 0.0
        %1812 = vmatpush1.xpose.msra.mxu0 0.0
        %1813 = vmatprep.subr.mxu0 0.0
        %1814 = vmatpush1.xpose.msra.mxu0 0.0
        %1815 = vmatprep.subr.mxu0 0.0
        %1816 = vmatpush1.xpose.msra.mxu0 0.0
        %1817 = vmatprep.subr.mxu0 0.0
        %1818 = vmatpush1.xpose.msra.mxu0 0.0
        %1819 = vmatprep.subr.mxu0 0.0
        %1820 = vmatpush1.xpose.msra.mxu0 0.0
        %1821 = vmatprep.subr.mxu0 0.0
        %1822 = vmatpush1.xpose.msra.mxu0 0.0
        %1823 = vmatprep.subr.mxu0 0.0
        %1824 = vmatpush1.xpose.msra.mxu0 0.0
        %1825 = vmatprep.subr.mxu0 0.0
        %1826 = vmatpush1.xpose.msra.mxu0 0.0
        %1827 = vmatprep.subr.mxu0 0.0
        %1828 = vmatpush1.xpose.msra.mxu0 0.0
        %1829 = vmatprep.subr.mxu0 0.0
        %1830 = vmatpush1.xpose.msra.mxu0 0.0
        %1831 = vmatprep.subr.mxu0 0.0
        %1832 = vmatpush1.xpose.msra.mxu0 0.0
        %1833 = vmatprep.mubr.f32.mxu0 0.0
        %1834 = vmatmul.mubr.f32.gmra.mrb[0].mxu0 %v1758
        %v1835 = vpop.f32.mrb[0].mxu0
        %v1836 = vadd.f32 0.0, %v1835
        %v1837 = vpop.f32.mrb[0].mxu0
        %1838 = vmatprep.mubr.f32.mxu0 0.0
        %1839 = vmatmul.mubr.f32.gmra.mrb[0].mxu0 %v1761
        %v1840 = vpop.f32.mrb[0].mxu0
        %v1841 = vadd.f32 0.0, %v1840
        %v1842 = vpop.f32.mrb[0].mxu0
        %1843 = vdwg.mxu0
        %vm1844 = vcmask 130048
        %v1845 = vsel %vm1844, %v1575, -inf
        %1846 = vmax.xlane.f32.xlu0 %v1845
        %v1847 = vpop.xlane.xlu0 %1846
        %v1848 = vsel %vm1844, %v1580, -inf
        %1849 = vmax.xlane.f32.xlu0 %v1848
        %v1850 = vpop.xlane.xlu0 %1849
        %v1851 = vsel %vm1844, %v1662, -inf
        %1852 = vmax.xlane.f32.xlu0 %v1851
        %v1853 = vpop.xlane.xlu0 %1852
        %v1854 = vsel %vm1844, %v1667, -inf
        %1855 = vmax.xlane.f32.xlu0 %v1854
        %v1856 = vpop.xlane.xlu0 %1855
        %v1857 = vsel %vm1844, %v1749, -inf
        %1858 = vmax.xlane.f32.xlu0 %v1857
        %v1859 = vpop.xlane.xlu0 %1858
        %v1860 = vsel %vm1844, %v1754, -inf
        %1861 = vmax.xlane.f32.xlu0 %v1860
        %v1862 = vpop.xlane.xlu0 %1861
        %v1863 = vsel %vm1844, %v1836, -inf
        %1864 = vmax.xlane.f32.xlu0 %v1863
        %v1865 = vpop.xlane.xlu0 %1864
        %v1866 = vsel %vm1844, %v1841, -inf
        %1867 = vmax.xlane.f32.xlu0 %v1866
        %v1868 = vpop.xlane.xlu0 %1867
        %v1869 = vsub.f32 %v1575, %v1847
        %v1870 = vsub.f32 %v1580, %v1850
        %v1871 = vsub.f32 %v1662, %v1853
        %v1872 = vsub.f32 %v1667, %v1856
        %v1873 = vsub.f32 %v1749, %v1859
        %v1874 = vsub.f32 %v1754, %v1862
        %v1875 = vsub.f32 %v1836, %v1865
        %v1876 = vsub.f32 %v1841, %v1868
        %v1877 = vmul.f32 %v1869, 1.442695
        %v1878 = vpow.pop %v1877
        %v1879 = vmul.f32 %v1870, 1.442695
        %v1880 = vpow.pop %v1879
        %v1881 = vmul.f32 %v1871, 1.442695
        %v1882 = vpow.pop %v1881
        %v1883 = vmul.f32 %v1872, 1.442695
        %v1884 = vpow.pop %v1883
        %v1885 = vmul.f32 %v1873, 1.442695
        %v1886 = vpow.pop %v1885
        %v1887 = vmul.f32 %v1874, 1.442695
        %v1888 = vpow.pop %v1887
        %v1889 = vmul.f32 %v1875, 1.442695
        %v1890 = vpow.pop %v1889
        %v1891 = vmul.f32 %v1876, 1.442695
        %v1892 = vpow.pop %v1891
        %v1893 = vsel %vm1844, %v1878, 0.0
        %1894 = vadd.xlane.f32.xlu0 %v1893
        %v1895 = vpop.xlane.xlu0 %1894
        %v1896 = vsel %vm1844, %v1880, 0.0
        %1897 = vadd.xlane.f32.xlu0 %v1896
        %v1898 = vpop.xlane.xlu0 %1897
        %v1899 = vsel %vm1844, %v1882, 0.0
        %1900 = vadd.xlane.f32.xlu0 %v1899
        %v1901 = vpop.xlane.xlu0 %1900
        %v1902 = vsel %vm1844, %v1884, 0.0
        %1903 = vadd.xlane.f32.xlu0 %v1902
        %v1904 = vpop.xlane.xlu0 %1903
        %v1905 = vsel %vm1844, %v1886, 0.0
        %1906 = vadd.xlane.f32.xlu0 %v1905
        %v1907 = vpop.xlane.xlu0 %1906
        %v1908 = vsel %vm1844, %v1888, 0.0
        %1909 = vadd.xlane.f32.xlu0 %v1908
        %v1910 = vpop.xlane.xlu0 %1909
        %v1911 = vsel %vm1844, %v1890, 0.0
        %1912 = vadd.xlane.f32.xlu0 %v1911
        %v1913 = vpop.xlane.xlu0 %1912
        %v1914 = vsel %vm1844, %v1892, 0.0
        %1915 = vadd.xlane.f32.xlu0 %v1914
        %v1916 = vpop.xlane.xlu0 %1915
        %v1917 = vrcp.pop %v1895
        %v1918 = vrcp.pop %v1898
        %v1919 = vrcp.pop %v1901
        %v1920 = vrcp.pop %v1904
        %v1921 = vrcp.pop %v1907
        %v1922 = vrcp.pop %v1910
        %v1923 = vrcp.pop %v1913
        %v1924 = vrcp.pop %v1916
        %v1925 = vmul.f32 %v1878, %v1917
        %v1926 = vmul.f32 %v1880, %v1918
        %v1927 = vmul.f32 %v1882, %v1919
        %v1928 = vmul.f32 %v1884, %v1920
        %v1929 = vmul.f32 %v1886, %v1921
        %v1930 = vmul.f32 %v1888, %v1922
        %v1931 = vmul.f32 %v1890, %v1923
        %v1932 = vmul.f32 %v1892, %v1924
        %v1934 = vsel %vm1844, %v1925, 0
        %v1937 = vsel %vm1844, %v1926, 0
        %1939 = vmatprep.subr.mxu0 0.0
        %1940 = vmatpush1.msra.mxu0 %v1262
        %1941 = vmatprep.subr.mxu0 0.0
        %1942 = vmatpush1.msra.mxu0 %v1267
        %1943 = vmatprep.subr.mxu0 0.0
        %1944 = vmatpush1.msra.mxu0 0.0
        %1945 = vmatprep.subr.mxu0 0.0
        %1946 = vmatpush1.msra.mxu0 0.0
        %1947 = vmatprep.subr.mxu0 0.0
        %1948 = vmatpush1.msra.mxu0 0.0
        %1949 = vmatprep.subr.mxu0 0.0
        %1950 = vmatpush1.msra.mxu0 0.0
        %1951 = vmatprep.subr.mxu0 0.0
        %1952 = vmatpush1.msra.mxu0 0.0
        %1953 = vmatprep.subr.mxu0 0.0
        %1954 = vmatpush1.msra.mxu0 0.0
        %1955 = vmatprep.subr.mxu0 0.0
        %1956 = vmatpush1.msra.mxu0 0.0
        %1957 = vmatprep.subr.mxu0 0.0
        %1958 = vmatpush1.msra.mxu0 0.0
        %1959 = vmatprep.subr.mxu0 0.0
        %1960 = vmatpush1.msra.mxu0 0.0
        %1961 = vmatprep.subr.mxu0 0.0
        %1962 = vmatpush1.msra.mxu0 0.0
        %1963 = vmatprep.subr.mxu0 0.0
        %1964 = vmatpush1.msra.mxu0 0.0
        %1965 = vmatprep.subr.mxu0 0.0
        %1966 = vmatpush1.msra.mxu0 0.0
        %1967 = vmatprep.subr.mxu0 0.0
        %1968 = vmatpush1.msra.mxu0 0.0
        %1969 = vmatprep.subr.mxu0 0.0
        %1970 = vmatpush1.msra.mxu0 0.0
        %1971 = vmatprep.subr.mxu0 0.0
        %1972 = vmatpush1.msra.mxu0 0.0
        %1973 = vmatprep.subr.mxu0 0.0
        %1974 = vmatpush1.msra.mxu0 0.0
        %1975 = vmatprep.subr.mxu0 0.0
        %1976 = vmatpush1.msra.mxu0 0.0
        %1977 = vmatprep.subr.mxu0 0.0
        %1978 = vmatpush1.msra.mxu0 0.0
        %1979 = vmatprep.subr.mxu0 0.0
        %1980 = vmatpush1.msra.mxu0 0.0
        %1981 = vmatprep.subr.mxu0 0.0
        %1982 = vmatpush1.msra.mxu0 0.0
        %1983 = vmatprep.subr.mxu0 0.0
        %1984 = vmatpush1.msra.mxu0 0.0
        %1985 = vmatprep.subr.mxu0 0.0
        %1986 = vmatpush1.msra.mxu0 0.0
        %1987 = vmatprep.subr.mxu0 0.0
        %1988 = vmatpush1.msra.mxu0 0.0
        %1989 = vmatprep.subr.mxu0 0.0
        %1990 = vmatpush1.msra.mxu0 0.0
        %1991 = vmatprep.subr.mxu0 0.0
        %1992 = vmatpush1.msra.mxu0 0.0
        %1993 = vmatprep.subr.mxu0 0.0
        %1994 = vmatpush1.msra.mxu0 0.0
        %1995 = vmatprep.subr.mxu0 0.0
        %1996 = vmatpush1.msra.mxu0 0.0
        %1997 = vmatprep.subr.mxu0 0.0
        %1998 = vmatpush1.msra.mxu0 0.0
        %1999 = vmatprep.subr.mxu0 0.0
        %2000 = vmatpush1.msra.mxu0 0.0
        %2001 = vmatprep.subr.mxu0 0.0
        %2002 = vmatpush1.msra.mxu0 0.0
        %2003 = vmatprep.mubr.f32.mxu0 0.0
        %2004 = vmatmul.mubr.f32.gmra.mrb[0].mxu0 %v1934
        %v2005 = vpop.f32.mrb[0].mxu0
        %v2006 = vadd.f32 0.0, %v2005
        %v2007 = vpop.f32.mrb[0].mxu0
        %2008 = vmatprep.mubr.f32.mxu0 0.0
        %2009 = vmatmul.mubr.f32.gmra.mrb[0].mxu0 %v1937
        %v2010 = vpop.f32.mrb[0].mxu0
        %v2011 = vadd.f32 0.0, %v2010
        %v2012 = vpop.f32.mrb[0].mxu0
        %2013 = vdwg.mxu0
        %v2015 = vsel %vm1844, %v1927, 0
        %v2018 = vsel %vm1844, %v1928, 0
        %2020 = vmatprep.subr.mxu0 0.0
        %2021 = vmatpush1.msra.mxu0 %v1337
        %2022 = vmatprep.subr.mxu0 0.0
        %2023 = vmatpush1.msra.mxu0 %v1342
        %2024 = vmatprep.subr.mxu0 0.0
        %2025 = vmatpush1.msra.mxu0 0.0
        %2026 = vmatprep.subr.mxu0 0.0
        %2027 = vmatpush1.msra.mxu0 0.0
        %2028 = vmatprep.subr.mxu0 0.0
        %2029 = vmatpush1.msra.mxu0 0.0
        %2030 = vmatprep.subr.mxu0 0.0
        %2031 = vmatpush1.msra.mxu0 0.0
        %2032 = vmatprep.subr.mxu0 0.0
        %2033 = vmatpush1.msra.mxu0 0.0
        %2034 = vmatprep.subr.mxu0 0.0
        %2035 = vmatpush1.msra.mxu0 0.0
        %2036 = vmatprep.subr.mxu0 0.0
        %2037 = vmatpush1.msra.mxu0 0.0
        %2038 = vmatprep.subr.mxu0 0.0
        %2039 = vmatpush1.msra.mxu0 0.0
        %2040 = vmatprep.subr.mxu0 0.0
        %2041 = vmatpush1.msra.mxu0 0.0
        %2042 = vmatprep.subr.mxu0 0.0
        %2043 = vmatpush1.msra.mxu0 0.0
        %2044 = vmatprep.subr.mxu0 0.0
        %2045 = vmatpush1.msra.mxu0 0.0
        %2046 = vmatprep.subr.mxu0 0.0
        %2047 = vmatpush1.msra.mxu0 0.0
        %2048 = vmatprep.subr.mxu0 0.0
        %2049 = vmatpush1.msra.mxu0 0.0
        %2050 = vmatprep.subr.mxu0 0.0
        %2051 = vmatpush1.msra.mxu0 0.0
        %2052 = vmatprep.subr.mxu0 0.0
        %2053 = vmatpush1.msra.mxu0 0.0
        %2054 = vmatprep.subr.mxu0 0.0
        %2055 = vmatpush1.msra.mxu0 0.0
        %2056 = vmatprep.subr.mxu0 0.0
        %2057 = vmatpush1.msra.mxu0 0.0
        %2058 = vmatprep.subr.mxu0 0.0
        %2059 = vmatpush1.msra.mxu0 0.0
        %2060 = vmatprep.subr.mxu0 0.0
        %2061 = vmatpush1.msra.mxu0 0.0
        %2062 = vmatprep.subr.mxu0 0.0
        %2063 = vmatpush1.msra.mxu0 0.0
        %2064 = vmatprep.subr.mxu0 0.0
        %2065 = vmatpush1.msra.mxu0 0.0
        %2066 = vmatprep.subr.mxu0 0.0
        %2067 = vmatpush1.msra.mxu0 0.0
        %2068 = vmatprep.subr.mxu0 0.0
        %2069 = vmatpush1.msra.mxu0 0.0
        %2070 = vmatprep.subr.mxu0 0.0
        %2071 = vmatpush1.msra.mxu0 0.0
        %2072 = vmatprep.subr.mxu0 0.0
        %2073 = vmatpush1.msra.mxu0 0.0
        %2074 = vmatprep.subr.mxu0 0.0
        %2075 = vmatpush1.msra.mxu0 0.0
        %2076 = vmatprep.subr.mxu0 0.0
        %2077 = vmatpush1.msra.mxu0 0.0
        %2078 = vmatprep.subr.mxu0 0.0
        %2079 = vmatpush1.msra.mxu0 0.0
        %2080 = vmatprep.subr.mxu0 0.0
        %2081 = vmatpush1.msra.mxu0 0.0
        %2082 = vmatprep.subr.mxu0 0.0
        %2083 = vmatpush1.msra.mxu0 0.0
        %2084 = vmatprep.mubr.f32.mxu0 0.0
        %2085 = vmatmul.mubr.f32.gmra.mrb[0].mxu0 %v2015
        %v2086 = vpop.f32.mrb[0].mxu0
        %v2087 = vadd.f32 0.0, %v2086
        %v2088 = vpop.f32.mrb[0].mxu0
        %2089 = vmatprep.mubr.f32.mxu0 0.0
        %2090 = vmatmul.mubr.f32.gmra.mrb[0].mxu0 %v2018
        %v2091 = vpop.f32.mrb[0].mxu0
        %v2092 = vadd.f32 0.0, %v2091
        %v2093 = vpop.f32.mrb[0].mxu0
        %2094 = vdwg.mxu0
        %v2096 = vsel %vm1844, %v1929, 0
        %v2099 = vsel %vm1844, %v1930, 0
        %2101 = vmatprep.subr.mxu0 0.0
        %2102 = vmatpush1.msra.mxu0 %v1412
        %2103 = vmatprep.subr.mxu0 0.0
        %2104 = vmatpush1.msra.mxu0 %v1417
        %2105 = vmatprep.subr.mxu0 0.0
        %2106 = vmatpush1.msra.mxu0 0.0
        %2107 = vmatprep.subr.mxu0 0.0
        %2108 = vmatpush1.msra.mxu0 0.0
        %2109 = vmatprep.subr.mxu0 0.0
        %2110 = vmatpush1.msra.mxu0 0.0
        %2111 = vmatprep.subr.mxu0 0.0
        %2112 = vmatpush1.msra.mxu0 0.0
        %2113 = vmatprep.subr.mxu0 0.0
        %2114 = vmatpush1.msra.mxu0 0.0
        %2115 = vmatprep.subr.mxu0 0.0
        %2116 = vmatpush1.msra.mxu0 0.0
        %2117 = vmatprep.subr.mxu0 0.0
        %2118 = vmatpush1.msra.mxu0 0.0
        %2119 = vmatprep.subr.mxu0 0.0
        %2120 = vmatpush1.msra.mxu0 0.0
        %2121 = vmatprep.subr.mxu0 0.0
        %2122 = vmatpush1.msra.mxu0 0.0
        %2123 = vmatprep.subr.mxu0 0.0
        %2124 = vmatpush1.msra.mxu0 0.0
        %2125 = vmatprep.subr.mxu0 0.0
        %2126 = vmatpush1.msra.mxu0 0.0
        %2127 = vmatprep.subr.mxu0 0.0
        %2128 = vmatpush1.msra.mxu0 0.0
        %2129 = vmatprep.subr.mxu0 0.0
        %2130 = vmatpush1.msra.mxu0 0.0
        %2131 = vmatprep.subr.mxu0 0.0
        %2132 = vmatpush1.msra.mxu0 0.0
        %2133 = vmatprep.subr.mxu0 0.0
        %2134 = vmatpush1.msra.mxu0 0.0
        %2135 = vmatprep.subr.mxu0 0.0
        %2136 = vmatpush1.msra.mxu0 0.0
        %2137 = vmatprep.subr.mxu0 0.0
        %2138 = vmatpush1.msra.mxu0 0.0
        %2139 = vmatprep.subr.mxu0 0.0
        %2140 = vmatpush1.msra.mxu0 0.0
        %2141 = vmatprep.subr.mxu0 0.0
        %2142 = vmatpush1.msra.mxu0 0.0
        %2143 = vmatprep.subr.mxu0 0.0
        %2144 = vmatpush1.msra.mxu0 0.0
        %2145 = vmatprep.subr.mxu0 0.0
        %2146 = vmatpush1.msra.mxu0 0.0
        %2147 = vmatprep.subr.mxu0 0.0
        %2148 = vmatpush1.msra.mxu0 0.0
        %2149 = vmatprep.subr.mxu0 0.0
        %2150 = vmatpush1.msra.mxu0 0.0
        %2151 = vmatprep.subr.mxu0 0.0
        %2152 = vmatpush1.msra.mxu0 0.0
        %2153 = vmatprep.subr.mxu0 0.0
        %2154 = vmatpush1.msra.mxu0 0.0
        %2155 = vmatprep.subr.mxu0 0.0
        %2156 = vmatpush1.msra.mxu0 0.0
        %2157 = vmatprep.subr.mxu0 0.0
        %2158 = vmatpush1.msra.mxu0 0.0
        %2159 = vmatprep.subr.mxu0 0.0
        %2160 = vmatpush1.msra.mxu0 0.0
        %2161 = vmatprep.subr.mxu0 0.0
        %2162 = vmatpush1.msra.mxu0 0.0
        %2163 = vmatprep.subr.mxu0 0.0
        %2164 = vmatpush1.msra.mxu0 0.0
        %2165 = vmatprep.mubr.f32.mxu0 0.0
        %2166 = vmatmul.mubr.f32.gmra.mrb[0].mxu0 %v2096
        %v2167 = vpop.f32.mrb[0].mxu0
        %v2168 = vadd.f32 0.0, %v2167
        %v2169 = vpop.f32.mrb[0].mxu0
        %2170 = vmatprep.mubr.f32.mxu0 0.0
        %2171 = vmatmul.mubr.f32.gmra.mrb[0].mxu0 %v2099
        %v2172 = vpop.f32.mrb[0].mxu0
        %v2173 = vadd.f32 0.0, %v2172
        %v2174 = vpop.f32.mrb[0].mxu0
        %2175 = vdwg.mxu0
        %v2177 = vsel %vm1844, %v1931, 0
        %v2180 = vsel %vm1844, %v1932, 0
        %2182 = vmatprep.subr.mxu0 0.0
        %2183 = vmatpush1.msra.mxu0 %v1487
        %2184 = vmatprep.subr.mxu0 0.0
        %2185 = vmatpush1.msra.mxu0 %v1492
        %2186 = vmatprep.subr.mxu0 0.0
        %2187 = vmatpush1.msra.mxu0 0.0
        %2188 = vmatprep.subr.mxu0 0.0
        %2189 = vmatpush1.msra.mxu0 0.0
        %2190 = vmatprep.subr.mxu0 0.0
        %2191 = vmatpush1.msra.mxu0 0.0
        %2192 = vmatprep.subr.mxu0 0.0
        %2193 = vmatpush1.msra.mxu0 0.0
        %2194 = vmatprep.subr.mxu0 0.0
        %2195 = vmatpush1.msra.mxu0 0.0
        %2196 = vmatprep.subr.mxu0 0.0
        %2197 = vmatpush1.msra.mxu0 0.0
        %2198 = vmatprep.subr.mxu0 0.0
        %2199 = vmatpush1.msra.mxu0 0.0
        %2200 = vmatprep.subr.mxu0 0.0
        %2201 = vmatpush1.msra.mxu0 0.0
        %2202 = vmatprep.subr.mxu0 0.0
        %2203 = vmatpush1.msra.mxu0 0.0
        %2204 = vmatprep.subr.mxu0 0.0
        %2205 = vmatpush1.msra.mxu0 0.0
        %2206 = vmatprep.subr.mxu0 0.0
        %2207 = vmatpush1.msra.mxu0 0.0
        %2208 = vmatprep.subr.mxu0 0.0
        %2209 = vmatpush1.msra.mxu0 0.0
        %2210 = vmatprep.subr.mxu0 0.0
        %2211 = vmatpush1.msra.mxu0 0.0
        %2212 = vmatprep.subr.mxu0 0.0
        %2213 = vmatpush1.msra.mxu0 0.0
        %2214 = vmatprep.subr.mxu0 0.0
        %2215 = vmatpush1.msra.mxu0 0.0
        %2216 = vmatprep.subr.mxu0 0.0
        %2217 = vmatpush1.msra.mxu0 0.0
        %2218 = vmatprep.subr.mxu0 0.0
        %2219 = vmatpush1.msra.mxu0 0.0
        %2220 = vmatprep.subr.mxu0 0.0
        %2221 = vmatpush1.msra.mxu0 0.0
        %2222 = vmatprep.subr.mxu0 0.0
        %2223 = vmatpush1.msra.mxu0 0.0
        %2224 = vmatprep.subr.mxu0 0.0
        %2225 = vmatpush1.msra.mxu0 0.0
        %2226 = vmatprep.subr.mxu0 0.0
        %2227 = vmatpush1.msra.mxu0 0.0
        %2228 = vmatprep.subr.mxu0 0.0
        %2229 = vmatpush1.msra.mxu0 0.0
        %2230 = vmatprep.subr.mxu0 0.0
        %2231 = vmatpush1.msra.mxu0 0.0
        %2232 = vmatprep.subr.mxu0 0.0
        %2233 = vmatpush1.msra.mxu0 0.0
        %2234 = vmatprep.subr.mxu0 0.0
        %2235 = vmatpush1.msra.mxu0 0.0
        %2236 = vmatprep.subr.mxu0 0.0
        %2237 = vmatpush1.msra.mxu0 0.0
        %2238 = vmatprep.subr.mxu0 0.0
        %2239 = vmatpush1.msra.mxu0 0.0
        %2240 = vmatprep.subr.mxu0 0.0
        %2241 = vmatpush1.msra.mxu0 0.0
        %2242 = vmatprep.subr.mxu0 0.0
        %2243 = vmatpush1.msra.mxu0 0.0
        %2244 = vmatprep.subr.mxu0 0.0
        %2245 = vmatpush1.msra.mxu0 0.0
        %2246 = vmatprep.mubr.f32.mxu0 0.0
        %2247 = vmatmul.mubr.f32.gmra.mrb[0].mxu0 %v2177
        %v2248 = vpop.f32.mrb[0].mxu0
        %v2249 = vadd.f32 0.0, %v2248
        %v2250 = vpop.f32.mrb[0].mxu0
        %2251 = vmatprep.mubr.f32.mxu0 0.0
        %2252 = vmatmul.mubr.f32.gmra.mrb[0].mxu0 %v2180
        %v2253 = vpop.f32.mrb[0].mxu0
        %v2254 = vadd.f32 0.0, %v2253
        %v2255 = vpop.f32.mrb[0].mxu0
        %2256 = vdwg.mxu0
        %v2257 = vld [vmem:[%s6] sm:$0xff]
        %v2258 = vld [vmem:[%s6 + $0x8] sm:$0xff]
        %v2259 = vld [vmem:[%s6 + $0x10] sm:$0xff]
        %v2260 = vld [vmem:[%s6 + $0x18] sm:$0xff]
        %v2261 = vld [vmem:[%s6 + $0x20] sm:$0xff]
        %v2262 = vld [vmem:[%s6 + $0x28] sm:$0xff]
        %v2263 = vld [vmem:[%s6 + $0x30] sm:$0xff]
        %v2264 = vld [vmem:[%s6 + $0x38] sm:$0xff]
        %v2265 = vld [vmem:[%s6 + $0x40] sm:$0xff]
        %v2266 = vld [vmem:[%s6 + $0x48] sm:$0xff]
        %v2267 = vld [vmem:[%s6 + $0x50] sm:$0xff]
        %v2268 = vld [vmem:[%s6 + $0x58] sm:$0xff]
        %v2269 = vld [vmem:[%s6 + $0x60] sm:$0xff]
        %v2270 = vld [vmem:[%s6 + $0x68] sm:$0xff]
        %v2271 = vld [vmem:[%s6 + $0x70] sm:$0xff]
        %v2272 = vld [vmem:[%s6 + $0x78] sm:$0xff]
        %v2274 = vsel %vm1495, %v2006, 0
        %v2277 = vsel %vm1495, %v2011, 0
        %2279 = vmatprep.subr.mxu0 0.0
        %2280 = vmatpush1.msra.mxu0 %v2257
        %2281 = vmatprep.subr.mxu0 0.0
        %2282 = vmatpush1.msra.mxu0 %v2258
        %2283 = vmatprep.subr.mxu0 0.0
        %2284 = vmatpush1.msra.mxu0 %v2259
        %2285 = vmatprep.subr.mxu0 0.0
        %2286 = vmatpush1.msra.mxu0 %v2260
        %2287 = vmatprep.subr.mxu0 0.0
        %2288 = vmatpush1.msra.mxu0 0.0
        %2289 = vmatprep.subr.mxu0 0.0
        %2290 = vmatpush1.msra.mxu0 0.0
        %2291 = vmatprep.subr.mxu0 0.0
        %2292 = vmatpush1.msra.mxu0 0.0
        %2293 = vmatprep.subr.mxu0 0.0
        %2294 = vmatpush1.msra.mxu0 0.0
        %2295 = vmatprep.subr.mxu0 0.0
        %2296 = vmatpush1.msra.mxu0 0.0
        %2297 = vmatprep.subr.mxu0 0.0
        %2298 = vmatpush1.msra.mxu0 0.0
        %2299 = vmatprep.subr.mxu0 0.0
        %2300 = vmatpush1.msra.mxu0 0.0
        %2301 = vmatprep.subr.mxu0 0.0
        %2302 = vmatpush1.msra.mxu0 0.0
        %2303 = vmatprep.subr.mxu0 0.0
        %2304 = vmatpush1.msra.mxu0 0.0
        %2305 = vmatprep.subr.mxu0 0.0
        %2306 = vmatpush1.msra.mxu0 0.0
        %2307 = vmatprep.subr.mxu0 0.0
        %2308 = vmatpush1.msra.mxu0 0.0
        %2309 = vmatprep.subr.mxu0 0.0
        %2310 = vmatpush1.msra.mxu0 0.0
        %2311 = vmatprep.subr.mxu0 0.0
        %2312 = vmatpush1.msra.mxu0 0.0
        %2313 = vmatprep.subr.mxu0 0.0
        %2314 = vmatpush1.msra.mxu0 0.0
        %2315 = vmatprep.subr.mxu0 0.0
        %2316 = vmatpush1.msra.mxu0 0.0
        %2317 = vmatprep.subr.mxu0 0.0
        %2318 = vmatpush1.msra.mxu0 0.0
        %2319 = vmatprep.subr.mxu0 0.0
        %2320 = vmatpush1.msra.mxu0 0.0
        %2321 = vmatprep.subr.mxu0 0.0
        %2322 = vmatpush1.msra.mxu0 0.0
        %2323 = vmatprep.subr.mxu0 0.0
        %2324 = vmatpush1.msra.mxu0 0.0
        %2325 = vmatprep.subr.mxu0 0.0
        %2326 = vmatpush1.msra.mxu0 0.0
        %2327 = vmatprep.subr.mxu0 0.0
        %2328 = vmatpush1.msra.mxu0 0.0
        %2329 = vmatprep.subr.mxu0 0.0
        %2330 = vmatpush1.msra.mxu0 0.0
        %2331 = vmatprep.subr.mxu0 0.0
        %2332 = vmatpush1.msra.mxu0 0.0
        %2333 = vmatprep.subr.mxu0 0.0
        %2334 = vmatpush1.msra.mxu0 0.0
        %2335 = vmatprep.subr.mxu0 0.0
        %2336 = vmatpush1.msra.mxu0 0.0
        %2337 = vmatprep.subr.mxu0 0.0
        %2338 = vmatpush1.msra.mxu0 0.0
        %2339 = vmatprep.subr.mxu0 0.0
        %2340 = vmatpush1.msra.mxu0 0.0
        %2341 = vmatprep.subr.mxu0 0.0
        %2342 = vmatpush1.msra.mxu0 0.0
        %2343 = vmatprep.mubr.f32.mxu0 0.0
        %2344 = vmatmul.mubr.f32.gmra.mrb[0].mxu0 %v2274
        %v2345 = vpop.f32.mrb[0].mxu0
        %v2346 = vadd.f32 0.0, %v2345
        %v2347 = vpop.f32.mrb[0].mxu0
        %2348 = vmatprep.mubr.f32.mxu0 0.0
        %2349 = vmatmul.mubr.f32.gmra.mrb[0].mxu0 %v2277
        %v2350 = vpop.f32.mrb[0].mxu0
        %v2351 = vadd.f32 0.0, %v2350
        %v2352 = vpop.f32.mrb[0].mxu0
        %2353 = vdwg.mxu0
        %v2355 = vsel %vm1495, %v2087, 0
        %v2358 = vsel %vm1495, %v2092, 0
        %2360 = vmatprep.subr.mxu0 0.0
        %2361 = vmatpush1.msra.mxu0 %v2261
        %2362 = vmatprep.subr.mxu0 0.0
        %2363 = vmatpush1.msra.mxu0 %v2262
        %2364 = vmatprep.subr.mxu0 0.0
        %2365 = vmatpush1.msra.mxu0 %v2263
        %2366 = vmatprep.subr.mxu0 0.0
        %2367 = vmatpush1.msra.mxu0 %v2264
        %2368 = vmatprep.subr.mxu0 0.0
        %2369 = vmatpush1.msra.mxu0 0.0
        %2370 = vmatprep.subr.mxu0 0.0
        %2371 = vmatpush1.msra.mxu0 0.0
        %2372 = vmatprep.subr.mxu0 0.0
        %2373 = vmatpush1.msra.mxu0 0.0
        %2374 = vmatprep.subr.mxu0 0.0
        %2375 = vmatpush1.msra.mxu0 0.0
        %2376 = vmatprep.subr.mxu0 0.0
        %2377 = vmatpush1.msra.mxu0 0.0
        %2378 = vmatprep.subr.mxu0 0.0
        %2379 = vmatpush1.msra.mxu0 0.0
        %2380 = vmatprep.subr.mxu0 0.0
        %2381 = vmatpush1.msra.mxu0 0.0
        %2382 = vmatprep.subr.mxu0 0.0
        %2383 = vmatpush1.msra.mxu0 0.0
        %2384 = vmatprep.subr.mxu0 0.0
        %2385 = vmatpush1.msra.mxu0 0.0
        %2386 = vmatprep.subr.mxu0 0.0
        %2387 = vmatpush1.msra.mxu0 0.0
        %2388 = vmatprep.subr.mxu0 0.0
        %2389 = vmatpush1.msra.mxu0 0.0
        %2390 = vmatprep.subr.mxu0 0.0
        %2391 = vmatpush1.msra.mxu0 0.0
        %2392 = vmatprep.subr.mxu0 0.0
        %2393 = vmatpush1.msra.mxu0 0.0
        %2394 = vmatprep.subr.mxu0 0.0
        %2395 = vmatpush1.msra.mxu0 0.0
        %2396 = vmatprep.subr.mxu0 0.0
        %2397 = vmatpush1.msra.mxu0 0.0
        %2398 = vmatprep.subr.mxu0 0.0
        %2399 = vmatpush1.msra.mxu0 0.0
        %2400 = vmatprep.subr.mxu0 0.0
        %2401 = vmatpush1.msra.mxu0 0.0
        %2402 = vmatprep.subr.mxu0 0.0
        %2403 = vmatpush1.msra.mxu0 0.0
        %2404 = vmatprep.subr.mxu0 0.0
        %2405 = vmatpush1.msra.mxu0 0.0
        %2406 = vmatprep.subr.mxu0 0.0
        %2407 = vmatpush1.msra.mxu0 0.0
        %2408 = vmatprep.subr.mxu0 0.0
        %2409 = vmatpush1.msra.mxu0 0.0
        %2410 = vmatprep.subr.mxu0 0.0
        %2411 = vmatpush1.msra.mxu0 0.0
        %2412 = vmatprep.subr.mxu0 0.0
        %2413 = vmatpush1.msra.mxu0 0.0
        %2414 = vmatprep.subr.mxu0 0.0
        %2415 = vmatpush1.msra.mxu0 0.0
        %2416 = vmatprep.subr.mxu0 0.0
        %2417 = vmatpush1.msra.mxu0 0.0
        %2418 = vmatprep.subr.mxu0 0.0
        %2419 = vmatpush1.msra.mxu0 0.0
        %2420 = vmatprep.subr.mxu0 0.0
        %2421 = vmatpush1.msra.mxu0 0.0
        %2422 = vmatprep.subr.mxu0 0.0
        %2423 = vmatpush1.msra.mxu0 0.0
        %2424 = vmatprep.mubr.f32.mxu0 0.0
        %2425 = vmatmul.mubr.f32.gmra.mrb[0].mxu0 %v2355
        %v2426 = vpop.f32.mrb[0].mxu0
        %v2427 = vadd.f32 0.0, %v2426
        %v2428 = vpop.f32.mrb[0].mxu0
        %2429 = vmatprep.mubr.f32.mxu0 0.0
        %2430 = vmatmul.mubr.f32.gmra.mrb[0].mxu0 %v2358
        %v2431 = vpop.f32.mrb[0].mxu0
        %v2432 = vadd.f32 0.0, %v2431
        %v2433 = vpop.f32.mrb[0].mxu0
        %2434 = vdwg.mxu0
        %v2436 = vsel %vm1495, %v2168, 0
        %v2439 = vsel %vm1495, %v2173, 0
        %2441 = vmatprep.subr.mxu0 0.0
        %2442 = vmatpush1.msra.mxu0 %v2265
        %2443 = vmatprep.subr.mxu0 0.0
        %2444 = vmatpush1.msra.mxu0 %v2266
        %2445 = vmatprep.subr.mxu0 0.0
        %2446 = vmatpush1.msra.mxu0 %v2267
        %2447 = vmatprep.subr.mxu0 0.0
        %2448 = vmatpush1.msra.mxu0 %v2268
        %2449 = vmatprep.subr.mxu0 0.0
        %2450 = vmatpush1.msra.mxu0 0.0
        %2451 = vmatprep.subr.mxu0 0.0
        %2452 = vmatpush1.msra.mxu0 0.0
        %2453 = vmatprep.subr.mxu0 0.0
        %2454 = vmatpush1.msra.mxu0 0.0
        %2455 = vmatprep.subr.mxu0 0.0
        %2456 = vmatpush1.msra.mxu0 0.0
        %2457 = vmatprep.subr.mxu0 0.0
        %2458 = vmatpush1.msra.mxu0 0.0
        %2459 = vmatprep.subr.mxu0 0.0
        %2460 = vmatpush1.msra.mxu0 0.0
        %2461 = vmatprep.subr.mxu0 0.0
        %2462 = vmatpush1.msra.mxu0 0.0
        %2463 = vmatprep.subr.mxu0 0.0
        %2464 = vmatpush1.msra.mxu0 0.0
        %2465 = vmatprep.subr.mxu0 0.0
        %2466 = vmatpush1.msra.mxu0 0.0
        %2467 = vmatprep.subr.mxu0 0.0
        %2468 = vmatpush1.msra.mxu0 0.0
        %2469 = vmatprep.subr.mxu0 0.0
        %2470 = vmatpush1.msra.mxu0 0.0
        %2471 = vmatprep.subr.mxu0 0.0
        %2472 = vmatpush1.msra.mxu0 0.0
        %2473 = vmatprep.subr.mxu0 0.0
        %2474 = vmatpush1.msra.mxu0 0.0
        %2475 = vmatprep.subr.mxu0 0.0
        %2476 = vmatpush1.msra.mxu0 0.0
        %2477 = vmatprep.subr.mxu0 0.0
        %2478 = vmatpush1.msra.mxu0 0.0
        %2479 = vmatprep.subr.mxu0 0.0
        %2480 = vmatpush1.msra.mxu0 0.0
        %2481 = vmatprep.subr.mxu0 0.0
        %2482 = vmatpush1.msra.mxu0 0.0
        %2483 = vmatprep.subr.mxu0 0.0
        %2484 = vmatpush1.msra.mxu0 0.0
        %2485 = vmatprep.subr.mxu0 0.0
        %2486 = vmatpush1.msra.mxu0 0.0
        %2487 = vmatprep.subr.mxu0 0.0
        %2488 = vmatpush1.msra.mxu0 0.0
        %2489 = vmatprep.subr.mxu0 0.0
        %2490 = vmatpush1.msra.mxu0 0.0
        %2491 = vmatprep.subr.mxu0 0.0
        %2492 = vmatpush1.msra.mxu0 0.0
        %2493 = vmatprep.subr.mxu0 0.0
        %2494 = vmatpush1.msra.mxu0 0.0
        %2495 = vmatprep.subr.mxu0 0.0
        %2496 = vmatpush1.msra.mxu0 0.0
        %2497 = vmatprep.subr.mxu0 0.0
        %2498 = vmatpush1.msra.mxu0 0.0
        %2499 = vmatprep.subr.mxu0 0.0
        %2500 = vmatpush1.msra.mxu0 0.0
        %2501 = vmatprep.subr.mxu0 0.0
        %2502 = vmatpush1.msra.mxu0 0.0
        %2503 = vmatprep.subr.mxu0 0.0
        %2504 = vmatpush1.msra.mxu0 0.0
        %2505 = vmatprep.mubr.f32.mxu0 0.0
        %2506 = vmatmul.mubr.f32.gmra.mrb[0].mxu0 %v2436
        %v2507 = vpop.f32.mrb[0].mxu0
        %v2508 = vadd.f32 0.0, %v2507
        %v2509 = vpop.f32.mrb[0].mxu0
        %2510 = vmatprep.mubr.f32.mxu0 0.0
        %2511 = vmatmul.mubr.f32.gmra.mrb[0].mxu0 %v2439
        %v2512 = vpop.f32.mrb[0].mxu0
        %v2513 = vadd.f32 0.0, %v2512
        %v2514 = vpop.f32.mrb[0].mxu0
        %2515 = vdwg.mxu0
        %v2517 = vsel %vm1495, %v2249, 0
        %v2520 = vsel %vm1495, %v2254, 0
        %2522 = vmatprep.subr.mxu0 0.0
        %2523 = vmatpush1.msra.mxu0 %v2269
        %2524 = vmatprep.subr.mxu0 0.0
        %2525 = vmatpush1.msra.mxu0 %v2270
        %2526 = vmatprep.subr.mxu0 0.0
        %2527 = vmatpush1.msra.mxu0 %v2271
        %2528 = vmatprep.subr.mxu0 0.0
        %2529 = vmatpush1.msra.mxu0 %v2272
        %2530 = vmatprep.subr.mxu0 0.0
        %2531 = vmatpush1.msra.mxu0 0.0
        %2532 = vmatprep.subr.mxu0 0.0
        %2533 = vmatpush1.msra.mxu0 0.0
        %2534 = vmatprep.subr.mxu0 0.0
        %2535 = vmatpush1.msra.mxu0 0.0
        %2536 = vmatprep.subr.mxu0 0.0
        %2537 = vmatpush1.msra.mxu0 0.0
        %2538 = vmatprep.subr.mxu0 0.0
        %2539 = vmatpush1.msra.mxu0 0.0
        %2540 = vmatprep.subr.mxu0 0.0
        %2541 = vmatpush1.msra.mxu0 0.0
        %2542 = vmatprep.subr.mxu0 0.0
        %2543 = vmatpush1.msra.mxu0 0.0
        %2544 = vmatprep.subr.mxu0 0.0
        %2545 = vmatpush1.msra.mxu0 0.0
        %2546 = vmatprep.subr.mxu0 0.0
        %2547 = vmatpush1.msra.mxu0 0.0
        %2548 = vmatprep.subr.mxu0 0.0
        %2549 = vmatpush1.msra.mxu0 0.0
        %2550 = vmatprep.subr.mxu0 0.0
        %2551 = vmatpush1.msra.mxu0 0.0
        %2552 = vmatprep.subr.mxu0 0.0
        %2553 = vmatpush1.msra.mxu0 0.0
        %2554 = vmatprep.subr.mxu0 0.0
        %2555 = vmatpush1.msra.mxu0 0.0
        %2556 = vmatprep.subr.mxu0 0.0
        %2557 = vmatpush1.msra.mxu0 0.0
        %2558 = vmatprep.subr.mxu0 0.0
        %2559 = vmatpush1.msra.mxu0 0.0
        %2560 = vmatprep.subr.mxu0 0.0
        %2561 = vmatpush1.msra.mxu0 0.0
        %2562 = vmatprep.subr.mxu0 0.0
        %2563 = vmatpush1.msra.mxu0 0.0
        %2564 = vmatprep.subr.mxu0 0.0
        %2565 = vmatpush1.msra.mxu0 0.0
        %2566 = vmatprep.subr.mxu0 0.0
        %2567 = vmatpush1.msra.mxu0 0.0
        %2568 = vmatprep.subr.mxu0 0.0
        %2569 = vmatpush1.msra.mxu0 0.0
        %2570 = vmatprep.subr.mxu0 0.0
        %2571 = vmatpush1.msra.mxu0 0.0
        %2572 = vmatprep.subr.mxu0 0.0
        %2573 = vmatpush1.msra.mxu0 0.0
        %2574 = vmatprep.subr.mxu0 0.0
        %2575 = vmatpush1.msra.mxu0 0.0
        %2576 = vmatprep.subr.mxu0 0.0
        %2577 = vmatpush1.msra.mxu0 0.0
        %2578 = vmatprep.subr.mxu0 0.0
        %2579 = vmatpush1.msra.mxu0 0.0
        %2580 = vmatprep.subr.mxu0 0.0
        %2581 = vmatpush1.msra.mxu0 0.0
        %2582 = vmatprep.subr.mxu0 0.0
        %2583 = vmatpush1.msra.mxu0 0.0
        %2584 = vmatprep.subr.mxu0 0.0
        %2585 = vmatpush1.msra.mxu0 0.0
        %2586 = vmatprep.mubr.f32.mxu0 0.0
        %2587 = vmatmul.mubr.f32.gmra.mrb[0].mxu0 %v2517
        %v2588 = vpop.f32.mrb[0].mxu0
        %v2589 = vadd.f32 0.0, %v2588
        %v2590 = vpop.f32.mrb[0].mxu0
        %2591 = vmatprep.mubr.f32.mxu0 0.0
        %2592 = vmatmul.mubr.f32.gmra.mrb[0].mxu0 %v2520
        %v2593 = vpop.f32.mrb[0].mxu0
        %v2594 = vadd.f32 0.0, %v2593
        %v2595 = vpop.f32.mrb[0].mxu0
        %2596 = vdwg.mxu0
        %v2597 = vadd.f32 %v2346, %v2427
        %v2598 = vadd.f32 %v2597, %v2508
        %v2599 = vadd.f32 %v2598, %v2589
        %v2600 = vadd.f32 %v2351, %v2432
        %v2601 = vadd.f32 %v2600, %v2513
        %v2602 = vadd.f32 %v2601, %v2594
        %v2603 = vld [vmem:[%s7] sm:$0x1]
        %v2605 = vlaneseq
        %v2606 = vshrl.u32 %v2605, 7
        %v2607 = vsub.s32 0, %v2606
        %v2608 = vrot.slane %v2603, %v2607
        %v2610 = vadd.f32 %v2599, %v2608
        %v2611 = vadd.f32 %v2602, %v2608
        %2612 = vst [vmem:[%s298] sm:$0xff] %v2610
        %2613 = vst [vmem:[%s298 + $0x8] sm:$0xff] %v2611
        %s2614 = sand.u32 %s203, 1
        %s2615 = scalar_lea.sflag [#allocation3], %s2614
        %s2616 = sand.u32 %s203, 1
        %s2617 = smul.addr %s2616, 16
        %s2618 = scalar_lea.vmem [#allocation2], %s2617
        // Predicated region
        $region53: #{tpu_custom_call.1} parent=51 // pred_check
          %p2619 = pneg %p213
        $region54: #{tpu_custom_call.1} parent=51 // pred_check_branch
          %2621 = sbr.rel (%p2619) target = $region56
        $region55: #{tpu_custom_call.1} parent=51 // pred_region
          %s2623 = ssub.s32 256, 256
          %2624 = vsyncadd %s2615, %s2623
          %s2625 = smul.addr %s22, 2
          %s2626 = smul.addr %s2625, 128
          %s2627 = scalar_lea.hbm %s8, %s2626
          %s2628 = sshll.u32 %s2618, 4
          %s2629 = int_to_ptr.vmem [resolvable:$true] %s2628
          %2634 = dma.vmem_to_hbm [thread:$0]  %s2629, 256, %s2627, %s2615, 128, 128, 8
        $region56: #{tpu_custom_call.1} parent=51 // pred_fallthru
          _
      $region52: #{tpu_custom_call.1} parent=5 // pred_fallthru
        _
      %p2635 = scmp.le.s32.totalorder 2, %s17
      // Predicated region
      $region57: #{tpu_custom_call.1} parent=5 // pred_check
        %p2636 = pneg %p2635
      $region58: #{tpu_custom_call.1} parent=5 // pred_check_branch
        %2638 = sbr.rel (%p2636) target = $region60
      $region59: #{tpu_custom_call.1} parent=5 // pred_region
        %s2639 = ssub.s32 %s17, 2
        // Predicated region
        $region61: #{tpu_custom_call.1} parent=59 // pred_check
          %p2640 = pneg %p219
        $region62: #{tpu_custom_call.1} parent=59 // pred_check_branch
          %2642 = sbr.rel (%p2640) target = $region64
        $region63: #{tpu_custom_call.1} parent=59 // pred_region
          %s2643 = sand.u32 %s204, 1
          %s2644 = scalar_lea.sflag [#allocation3], %s2643
          %s2645 = sand.u32 %s204, 1
          %s2646 = smul.addr %s2645, 16
          %s2647 = scalar_lea.vmem [#allocation2], %s2646
          %2648 = dma.done %s2644, 256
        $region64: #{tpu_custom_call.1} parent=59 // pred_fallthru
          _
      $region60: #{tpu_custom_call.1} parent=5 // pred_fallthru
        _
    $region6: #{tpu_custom_call.1} parent=1 // loop_footer
      %s21 = sadd.s32 1, %s17
    $region7: #{tpu_custom_call.1} parent=1 // loop_footer_branch
      %16 = sbr.rel target = $region3
    $region8: #{tpu_custom_call.1} parent=1 // loop_exit
      _
    %2649 = vsyncpa [#allocation3], 1
    %s2650 = scalar_lea.sflag [#allocation3], 1
    %2651 = vsyncpa %s2650, 1

</llo_original>
